<compile_context>
chip_gen: v7x
topology: tpu7x:2x2x1
jax: 0.10.0
libtpu: 0.0.40
codegen_flags: <defaults>
</compile_context>

<pallas_src>
import jax
import jax.numpy as jnp
from jax.experimental import pallas as pl
from jax.experimental.pallas import tpu as pltpu


# Tap order shared by the weight packing (host side) and the im2col build (kernel).
_TAPS = tuple((dy, dx) for dy in (-1, 0, 1) for dx in (-1, 0, 1))


# ----------------------------------------------------------------------------
# Host-side helpers: weight packing, boundary masks, upsample operator
# ----------------------------------------------------------------------------
def pack3x3(w_oihw):
    """(O, I, 3, 3) PyTorch conv weight -> (O, 9*I) im2col weight (tap-major,
    channel-minor, in _TAPS order; must match _im2col_taps row layout)."""
    return jnp.concatenate(
        [w_oihw[:, :, dy + 1, dx + 1] for dy, dx in _TAPS], axis=1)


def _tap_masks(H, W):
    """(9, H*W) f32 masks: row t is 1 where tap _TAPS[t] stays inside the image
    (i.e. implements the conv's zero padding in flat-spatial layout)."""
    p = jnp.arange(H * W, dtype=jnp.int32)[None, :]
    yy, xx = p // W, p % W
    rows = []
    for dy, dx in _TAPS:
        ok = (yy + dy >= 0) & (yy + dy < H) & (xx + dx >= 0) & (xx + dx < W)
        rows.append(ok)
    return jnp.concatenate(rows, axis=0).astype(jnp.float32)


def _upsample2_matrix(H, W):
    """(Hlo*Wlo, H*W) 0/1 operator U with U[q, p] = 1 iff low-res flat index q is
    the nearest-neighbour source of high-res flat index p (scale factor 2)."""
    Hlo, Wlo = H // 2, W // 2
    p = jnp.arange(H * W, dtype=jnp.int32)[None, :]
    src = (p // W) // 2 * Wlo + (p % W) // 2
    q = jnp.arange(Hlo * Wlo, dtype=jnp.int32)[:, None]
    return (src == q).astype(jnp.float32)


# ----------------------------------------------------------------------------
# In-kernel helper: build the zero-padded 3x3 im2col matrix in VMEM scratch
# ----------------------------------------------------------------------------
def _im2col_taps(pieces, masks_ref, H, W, patches_ref):
    """pieces: list of (C_i, H*W) f32 arrays (channels on sublanes, lane = y*W+x).
    Writes (9 * sum(C_i), H*W) into patches_ref: tap-major, then pieces in order,
    then channels within a piece -- matching pack3x3 / the conv1 weight split."""
    HW = H * W
    ctot = sum(p.shape[0] for p in pieces)
    for t, (dy, dx) in enumerate(_TAPS):
        # rolled[p] = x[(p + dy*W + dx) mod HW]; out-of-image taps are masked to 0,
        # which reproduces the conv's zero padding exactly.
        shift = (-(dy * W + dx)) % HW
        mask = None if (dy == 0 and dx == 0) else masks_ref[t:t + 1, :]
        row = t * ctot
        for piece in pieces:
            c = piece.shape[0]
            shifted = piece if shift == 0 else pltpu.roll(piece, shift, 1)
            vals = shifted if mask is None else shifted * mask
            patches_ref[row:row + c, :] = vals
            row += c


# ----------------------------------------------------------------------------
# Kernel 1: fused [conv_up(1x1) at low res -> 2x nearest upsample -> implicit
#           concat([x2, x1]) -> 3x3 conv -> folded BN -> LeakyReLU(0.01)]
# ----------------------------------------------------------------------------
def _make_conv1_fused_kernel(H, W):
    def kernel(x1_ref, x2_ref, wup_ref, bup_ref, up_ref, masks_ref,
               w1p_ref, s1_ref, t1_ref, o_ref, patches_ref):
        # 1x1 conv_up at LOW resolution (commutes with nearest upsampling: 4x less work)
        y_lo = jnp.dot(wup_ref[...], x1_ref[0],
                       preferred_element_type=jnp.float32) + bup_ref[...]
        # nearest 2x upsample as a 0/1 matmul -> lane-dense (Cup, H*W)
        y_hi = jnp.dot(y_lo, up_ref[...], preferred_element_type=jnp.float32)
        # im2col over the implicit concat([x2, conv_up(up(x1))], channel)
        _im2col_taps([x2_ref[0], y_hi], masks_ref, H, W, patches_ref)
        # single K = 9*(C2+Cup) matmul + folded BN + LeakyReLU(0.01)
        h = jnp.dot(w1p_ref[...], patches_ref[...],
                    preferred_element_type=jnp.float32)
        h = h * s1_ref[...] + t1_ref[...]
        o_ref[0] = jnp.where(h >= 0, h, jnp.float32(0.01) * h).astype(o_ref.dtype)
    return kernel


# ----------------------------------------------------------------------------
# Kernel 2: 3x3 conv (pad=1) + folded BN + LeakyReLU(0.01), one image per step
# ----------------------------------------------------------------------------
def _make_conv3x3_kernel(H, W):
    def kernel(x_ref, masks_ref, wp_ref, s_ref, t_ref, o_ref, patches_ref):
        _im2col_taps([x_ref[0]], masks_ref, H, W, patches_ref)
        h = jnp.dot(wp_ref[...], patches_ref[...],
                    preferred_element_type=jnp.float32)
        h = h * s_ref[...] + t_ref[...]
        o_ref[0] = jnp.where(h >= 0, h, jnp.float32(0.01) * h).astype(o_ref.dtype)
    return kernel


# ----------------------------------------------------------------------------
# Parameter setup (deterministic) + forward pass
# ----------------------------------------------------------------------------
def fold_bn(conv_bias, gamma, beta, mean, var, eps=1e-5):
    s = gamma / jnp.sqrt(var + eps)
    t = (conv_bias - mean) * s + beta
    return s, t


def init_up_params(key, in_channels, out_channels):
    mid = out_channels                      # DoubleConv default mid_channels
    cat_c = out_channels * 2
    keys = jax.random.split(key, 6)

    def small(k, shape):
        return jax.random.normal(k, shape, jnp.float32) * 0.1

    # conv_up: 1x1 conv, PyTorch weight (Cout, Cin, 1, 1) -> (Cout, Cin)
    w_up = small(keys[0], (out_channels, in_channels))
    b_up = small(keys[1], (out_channels,))

    # DoubleConv conv1: PyTorch (mid, cat_c, 3, 3)
    w1 = small(keys[2], (mid, cat_c, 3, 3))
    b1 = small(keys[3], (mid,))
    g1 = 1.0 + 0.1 * jnp.arange(mid, dtype=jnp.float32)
    bt1 = 0.05 * jnp.arange(mid, dtype=jnp.float32)
    m1 = 0.02 * jnp.arange(mid, dtype=jnp.float32)
    v1 = 1.0 + 0.03 * jnp.arange(mid, dtype=jnp.float32)
    s1, t1 = fold_bn(b1, g1, bt1, m1, v1)

    # DoubleConv conv2: PyTorch (out, mid, 3, 3)
    w2 = small(keys[4], (out_channels, mid, 3, 3))
    b2 = small(keys[5], (out_channels,))
    g2 = 1.0 + 0.07 * jnp.arange(out_channels, dtype=jnp.float32)
    bt2 = -0.03 * jnp.arange(out_channels, dtype=jnp.float32)
    m2 = 0.01 * jnp.arange(out_channels, dtype=jnp.float32)
    v2 = 1.0 + 0.02 * jnp.arange(out_channels, dtype=jnp.float32)
    s2, t2 = fold_bn(b2, g2, bt2, m2, v2)

    return dict(w_up=w_up, b_up=b_up,
                w1=w1, s1=s1, t1=t1, w1p=pack3x3(w1),
                w2=w2, s2=s2, t2=t2, w2p=pack3x3(w2))


@jax.jit
def up_forward(params, x1_nchw, x2_nchw):
    B, Cin, Hlo, Wlo = x1_nchw.shape
    _, C2, H, W = x2_nchw.shape
    assert (H, W) == (2 * Hlo, 2 * Wlo), (x1_nchw.shape, x2_nchw.shape)
    HW, HWlo = H * W, Hlo * Wlo
    assert HW % 128 == 0, "flat spatial size must be lane-aligned (multiple of 128)"

    Cup = params["w_up"].shape[0]
    mid = params["w1p"].shape[0]
    Cout = params["w2p"].shape[0]
    Ctot = C2 + Cup
    assert params["w1"].shape[1] == Ctot

    # Flattened NCHW (lane axis = H*W) -- pure reshape, no transpose.
    x1f = x1_nchw.reshape(B, Cin, HWlo)
    x2f = x2_nchw.reshape(B, C2, HW)

    masks = _tap_masks(H, W)                      # (9, HW)   in-kernel zero padding
    upmat = _upsample2_matrix(H, W)               # (HWlo, HW) nearest-2x operator
    b_up_c = params["b_up"][:, None]
    s1_c, t1_c = params["s1"][:, None], params["t1"][:, None]
    s2_c, t2_c = params["s2"][:, None], params["t2"][:, None]

    # Stage 1: fused conv_up + upsample + concat + conv1 + BN + LeakyReLU.
    h1 = pl.pallas_call(
        _make_conv1_fused_kernel(H, W),
        out_shape=jax.ShapeDtypeStruct((B, mid, HW), jnp.float32),
        grid_spec=pltpu.PrefetchScalarGridSpec(
            num_scalar_prefetch=0,
            grid=(B,),
            in_specs=[
                pl.BlockSpec((1, Cin, HWlo), lambda b: (b, 0, 0)),
                pl.BlockSpec((1, C2, HW), lambda b: (b, 0, 0)),
                pl.BlockSpec((Cup, Cin), lambda b: (0, 0)),
                pl.BlockSpec((Cup, 1), lambda b: (0, 0)),
                pl.BlockSpec((HWlo, HW), lambda b: (0, 0)),
                pl.BlockSpec((9, HW), lambda b: (0, 0)),
                pl.BlockSpec((mid, 9 * Ctot), lambda b: (0, 0)),
                pl.BlockSpec((mid, 1), lambda b: (0, 0)),
                pl.BlockSpec((mid, 1), lambda b: (0, 0)),
            ],
            out_specs=pl.BlockSpec((1, mid, HW), lambda b: (b, 0, 0)),
            scratch_shapes=[pltpu.VMEM((9 * Ctot, HW), jnp.float32)],
        ),
        compiler_params=pltpu.CompilerParams(dimension_semantics=("parallel",)),
    )(x1f, x2f, params["w_up"], b_up_c, upmat, masks, params["w1p"], s1_c, t1_c)

    # Stage 2: conv2 + BN + LeakyReLU.
    out = pl.pallas_call(
        _make_conv3x3_kernel(H, W),
        out_shape=jax.ShapeDtypeStruct((B, Cout, HW), jnp.float32),
        grid_spec=pltpu.PrefetchScalarGridSpec(
            num_scalar_prefetch=0,
            grid=(B,),
            in_specs=[
                pl.BlockSpec((1, mid, HW), lambda b: (b, 0, 0)),
                pl.BlockSpec((9, HW), lambda b: (0, 0)),
                pl.BlockSpec((Cout, 9 * mid), lambda b: (0, 0)),
                pl.BlockSpec((Cout, 1), lambda b: (0, 0)),
                pl.BlockSpec((Cout, 1), lambda b: (0, 0)),
            ],
            out_specs=pl.BlockSpec((1, Cout, HW), lambda b: (b, 0, 0)),
            scratch_shapes=[pltpu.VMEM((9 * mid, HW), jnp.float32)],
        ),
        compiler_params=pltpu.CompilerParams(dimension_semantics=("parallel",)),
    )(h1, masks, params["w2p"], s2_c, t2_c)

    return out.reshape(B, Cout, H, W)


def up_forward_ref(params, x1, x2):
    """Pure-JAX reference (no Pallas), NCHW, matching the PyTorch module order."""
    y1 = jnp.repeat(jnp.repeat(x1, 2, axis=2), 2, axis=3)          # nearest 2x up
    y1 = jnp.einsum("oi,bihw->bohw", params["w_up"], y1) \
        + params["b_up"][None, :, None, None]                      # conv_up 1x1
    x = jnp.concatenate([x2, y1], axis=1)                          # cat([x2, x1], 1)

    def block(x, w, s, t):
        y = jax.lax.conv_general_dilated(
            x, w, (1, 1), "SAME",
            dimension_numbers=("NCHW", "OIHW", "NCHW"))
        y = y * s[None, :, None, None] + t[None, :, None, None]
        return jnp.where(y >= 0, y, 0.01 * y)

    x = block(x, params["w1"], params["s1"], params["t1"])
    x = block(x, params["w2"], params["s2"], params["t2"])
    return x


if __name__ == "__main__":
    B, in_channels, out_channels = 2, 4, 4
    H1 = W1 = 8                               # x1 spatial (pre-upsample)
    H2 = W2 = 2 * H1                          # x2 / output spatial

    key = jax.random.PRNGKey(0)
    k_p, k_x1, k_x2 = jax.random.split(key, 3)
    params = init_up_params(k_p, in_channels, out_channels)

    x1 = jax.random.normal(k_x1, (B, in_channels, H1, W1), jnp.float32)
    x2 = jax.random.normal(k_x2, (B, out_channels, H2, W2), jnp.float32)

    out = jax.block_until_ready(up_forward(params, x1, x2))
    ref = jax.block_until_ready(up_forward_ref(params, x1, x2))

    assert out.shape == (B, out_channels, H2, W2), out.shape
    err = float(jnp.max(jnp.abs(out - ref)))
    assert jnp.allclose(out, ref, atol=2e-4, rtol=2e-4), err
    print("KERNEL_OK")
</pallas_src>

<mosaic_0001>
module attributes {stable_mosaic.version = 11 : i64} {
  func.func @kernel(%arg0: i32, %arg1: memref<1x4x256xf32, #tpu.memory_space<vmem>>, %arg2: memref<9x256xf32, #tpu.memory_space<vmem>>, %arg3: memref<4x36xf32, #tpu.memory_space<vmem>>, %arg4: memref<4x1xf32, #tpu.memory_space<vmem>>, %arg5: memref<4x1xf32, #tpu.memory_space<vmem>>, %arg6: memref<1x4x256xf32, #tpu.memory_space<vmem>>, %arg7: memref<36x256xf32, #tpu.memory_space<vmem>>) attributes {dimension_semantics = [#tpu.dimension_semantics<parallel>], iteration_bounds = array<i64: 2>, scalar_prefetch = 0 : i64, scratch_operands = 1 : i64, tpu.core_type = #tpu.core_type<tc>, window_params = [{transform_indices = @transform_0, window_bounds = array<i64: 1, 4, 256>}, {pipeline_mode = #tpu.pipeline_mode<synchronous>, transform_indices = @transform_1, window_bounds = array<i64: 9, 256>}, {pipeline_mode = #tpu.pipeline_mode<synchronous>, transform_indices = @transform_2, window_bounds = array<i64: 4, 36>}, {pipeline_mode = #tpu.pipeline_mode<synchronous>, transform_indices = @transform_3, window_bounds = array<i64: 4, 1>}, {pipeline_mode = #tpu.pipeline_mode<synchronous>, transform_indices = @transform_4, window_bounds = array<i64: 4, 1>}, {transform_indices = @transform_5, window_bounds = array<i64: 1, 4, 256>}]} {
    %c0 = arith.constant 0 : index
    %c0_0 = arith.constant 0 : index
    %c0_1 = arith.constant 0 : index
    %0 = vector.load %arg1[%c0, %c0_0, %c0_1] : memref<1x4x256xf32, #tpu.memory_space<vmem>>, vector<1x4x256xf32>
    %1 = vector.shape_cast %0 : vector<1x4x256xf32> to vector<4x256xf32>
    %c0_2 = arith.constant 0 : index
    %c0_3 = arith.constant 0 : index
    %2 = vector.load %arg2[%c0_2, %c0_3] : memref<9x256xf32, #tpu.memory_space<vmem>>, vector<1x256xf32>
    %c17_i32 = arith.constant 17 : i32
    %3 = tpu.dynamic_rotate %1 by %c17_i32 dim 1 : vector<4x256xf32>, i32 -> vector<4x256xf32>
    %4 = vector.broadcast %2 : vector<1x256xf32> to vector<4x256xf32>
    %5 = arith.mulf %3, %4 : vector<4x256xf32>
    %c0_4 = arith.constant 0 : index
    %c0_5 = arith.constant 0 : index
    %6 = vector.load %arg7[%c0_4, %c0_5] : memref<36x256xf32, #tpu.memory_space<vmem>>, vector<4x256xf32>
    tpu.vector_store %arg7[%c0_4, %c0_5], %5 {strides = array<i32>} : memref<36x256xf32, #tpu.memory_space<vmem>>, vector<4x256xf32>,
    %c1 = arith.constant 1 : index
    %c0_6 = arith.constant 0 : index
    %7 = vector.load %arg2[%c1, %c0_6] : memref<9x256xf32, #tpu.memory_space<vmem>>, vector<1x256xf32>
    %c16_i32 = arith.constant 16 : i32
    %8 = tpu.dynamic_rotate %1 by %c16_i32 dim 1 : vector<4x256xf32>, i32 -> vector<4x256xf32>
    %9 = vector.broadcast %7 : vector<1x256xf32> to vector<4x256xf32>
    %10 = arith.mulf %8, %9 : vector<4x256xf32>
    %c4 = arith.constant 4 : index
    %c0_7 = arith.constant 0 : index
    %11 = vector.load %arg7[%c4, %c0_7] : memref<36x256xf32, #tpu.memory_space<vmem>>, vector<4x256xf32>
    tpu.vector_store %arg7[%c4, %c0_7], %10 {strides = array<i32>} : memref<36x256xf32, #tpu.memory_space<vmem>>, vector<4x256xf32>,
    %c2 = arith.constant 2 : index
    %c0_8 = arith.constant 0 : index
    %12 = vector.load %arg2[%c2, %c0_8] : memref<9x256xf32, #tpu.memory_space<vmem>>, vector<1x256xf32>
    %c15_i32 = arith.constant 15 : i32
    %13 = tpu.dynamic_rotate %1 by %c15_i32 dim 1 : vector<4x256xf32>, i32 -> vector<4x256xf32>
    %14 = vector.broadcast %12 : vector<1x256xf32> to vector<4x256xf32>
    %15 = arith.mulf %13, %14 : vector<4x256xf32>
    %c8 = arith.constant 8 : index
    %c0_9 = arith.constant 0 : index
    %16 = vector.load %arg7[%c8, %c0_9] : memref<36x256xf32, #tpu.memory_space<vmem>>, vector<4x256xf32>
    tpu.vector_store %arg7[%c8, %c0_9], %15 {strides = array<i32>} : memref<36x256xf32, #tpu.memory_space<vmem>>, vector<4x256xf32>,
    %c3 = arith.constant 3 : index
    %c0_10 = arith.constant 0 : index
    %17 = vector.load %arg2[%c3, %c0_10] : memref<9x256xf32, #tpu.memory_space<vmem>>, vector<1x256xf32>
    %c1_i32 = arith.constant 1 : i32
    %18 = tpu.dynamic_rotate %1 by %c1_i32 dim 1 : vector<4x256xf32>, i32 -> vector<4x256xf32>
    %19 = vector.broadcast %17 : vector<1x256xf32> to vector<4x256xf32>
    %20 = arith.mulf %18, %19 : vector<4x256xf32>
    %c12 = arith.constant 12 : index
    %c0_11 = arith.constant 0 : index
    %21 = vector.load %arg7[%c12, %c0_11] : memref<36x256xf32, #tpu.memory_space<vmem>>, vector<4x256xf32>
    tpu.vector_store %arg7[%c12, %c0_11], %20 {strides = array<i32>} : memref<36x256xf32, #tpu.memory_space<vmem>>, vector<4x256xf32>,
    %c16 = arith.constant 16 : index
    %c0_12 = arith.constant 0 : index
    %22 = vector.load %arg7[%c16, %c0_12] : memref<36x256xf32, #tpu.memory_space<vmem>>, vector<4x256xf32>
    tpu.vector_store %arg7[%c16, %c0_12], %1 {strides = array<i32>} : memref<36x256xf32, #tpu.memory_space<vmem>>, vector<4x256xf32>,
    %c5 = arith.constant 5 : index
    %c0_13 = arith.constant 0 : index
    %23 = vector.load %arg2[%c5, %c0_13] : memref<9x256xf32, #tpu.memory_space<vmem>>, vector<1x256xf32>
    %c255_i32 = arith.constant 255 : i32
    %24 = tpu.dynamic_rotate %1 by %c255_i32 dim 1 : vector<4x256xf32>, i32 -> vector<4x256xf32>
    %25 = vector.broadcast %23 : vector<1x256xf32> to vector<4x256xf32>
    %26 = arith.mulf %24, %25 : vector<4x256xf32>
    %c20 = arith.constant 20 : index
    %c0_14 = arith.constant 0 : index
    %27 = vector.load %arg7[%c20, %c0_14] : memref<36x256xf32, #tpu.memory_space<vmem>>, vector<4x256xf32>
    tpu.vector_store %arg7[%c20, %c0_14], %26 {strides = array<i32>} : memref<36x256xf32, #tpu.memory_space<vmem>>, vector<4x256xf32>,
    %c6 = arith.constant 6 : index
    %c0_15 = arith.constant 0 : index
    %28 = vector.load %arg2[%c6, %c0_15] : memref<9x256xf32, #tpu.memory_space<vmem>>, vector<1x256xf32>
    %c241_i32 = arith.constant 241 : i32
    %29 = tpu.dynamic_rotate %1 by %c241_i32 dim 1 : vector<4x256xf32>, i32 -> vector<4x256xf32>
    %30 = vector.broadcast %28 : vector<1x256xf32> to vector<4x256xf32>
    %31 = arith.mulf %29, %30 : vector<4x256xf32>
    %c24 = arith.constant 24 : index
    %c0_16 = arith.constant 0 : index
    %32 = vector.load %arg7[%c24, %c0_16] : memref<36x256xf32, #tpu.memory_space<vmem>>, vector<4x256xf32>
    tpu.vector_store %arg7[%c24, %c0_16], %31 {strides = array<i32>} : memref<36x256xf32, #tpu.memory_space<vmem>>, vector<4x256xf32>,
    %c7 = arith.constant 7 : index
    %c0_17 = arith.constant 0 : index
    %33 = vector.load %arg2[%c7, %c0_17] : memref<9x256xf32, #tpu.memory_space<vmem>>, vector<1x256xf32>
    %c240_i32 = arith.constant 240 : i32
    %34 = tpu.dynamic_rotate %1 by %c240_i32 dim 1 : vector<4x256xf32>, i32 -> vector<4x256xf32>
    %35 = vector.broadcast %33 : vector<1x256xf32> to vector<4x256xf32>
    %36 = arith.mulf %34, %35 : vector<4x256xf32>
    %c28 = arith.constant 28 : index
    %c0_18 = arith.constant 0 : index
    %37 = vector.load %arg7[%c28, %c0_18] : memref<36x256xf32, #tpu.memory_space<vmem>>, vector<4x256xf32>
    tpu.vector_store %arg7[%c28, %c0_18], %36 {strides = array<i32>} : memref<36x256xf32, #tpu.memory_space<vmem>>, vector<4x256xf32>,
    %c8_19 = arith.constant 8 : index
    %c0_20 = arith.constant 0 : index
    %38 = vector.load %arg2[%c8_19, %c0_20] : memref<9x256xf32, #tpu.memory_space<vmem>>, vector<1x256xf32>
    %c239_i32 = arith.constant 239 : i32
    %39 = tpu.dynamic_rotate %1 by %c239_i32 dim 1 : vector<4x256xf32>, i32 -> vector<4x256xf32>
    %40 = vector.broadcast %38 : vector<1x256xf32> to vector<4x256xf32>
    %41 = arith.mulf %39, %40 : vector<4x256xf32>
    %c32 = arith.constant 32 : index
    %c0_21 = arith.constant 0 : index
    %42 = vector.load %arg7[%c32, %c0_21] : memref<36x256xf32, #tpu.memory_space<vmem>>, vector<4x256xf32>
    tpu.vector_store %arg7[%c32, %c0_21], %41 {strides = array<i32>} : memref<36x256xf32, #tpu.memory_space<vmem>>, vector<4x256xf32>,
    %c0_22 = arith.constant 0 : index
    %c0_23 = arith.constant 0 : index
    %43 = vector.load %arg3[%c0_22, %c0_23] : memref<4x36xf32, #tpu.memory_space<vmem>>, vector<4x36xf32>
    %c0_24 = arith.constant 0 : index
    %c0_25 = arith.constant 0 : index
    %44 = vector.load %arg7[%c0_24, %c0_25] : memref<36x256xf32, #tpu.memory_space<vmem>>, vector<36x256xf32>
    %cst = arith.constant dense<0.000000e+00> : vector<4x256xf32>
    %45 = tpu.matmul %43, %44, %cst {dimension_numbers = #tpu.dot_dimension_numbers<[1], [0], [0], [1], [0, 0, 1, 1], [], []>} : vector<4x36xf32>, vector<36x256xf32>, vector<4x256xf32> -> vector<4x256xf32>
    %c0_26 = arith.constant 0 : index
    %c0_27 = arith.constant 0 : index
    %46 = vector.load %arg4[%c0_26, %c0_27] : memref<4x1xf32, #tpu.memory_space<vmem>>, vector<4x1xf32>
    %47 = vector.broadcast %46 : vector<4x1xf32> to vector<4x256xf32>
    %48 = arith.mulf %45, %47 : vector<4x256xf32>
    %c0_28 = arith.constant 0 : index
    %c0_29 = arith.constant 0 : index
    %49 = vector.load %arg5[%c0_28, %c0_29] : memref<4x1xf32, #tpu.memory_space<vmem>>, vector<4x1xf32>
    %50 = vector.broadcast %49 : vector<4x1xf32> to vector<4x256xf32>
    %51 = arith.addf %48, %50 : vector<4x256xf32>
    %cst_30 = arith.constant 0.000000e+00 : f32
    %52 = vector.broadcast %cst_30 : f32 to vector<4x256xf32>
    %53 = arith.cmpf oge, %51, %52 : vector<4x256xf32>
    %cst_31 = arith.constant 0.00999999977 : f32
    %54 = vector.broadcast %cst_31 : f32 to vector<4x256xf32>
    %55 = arith.mulf %54, %51 : vector<4x256xf32>
    %56 = arith.select %53, %51, %55 : vector<4x256xi1>, vector<4x256xf32>
    %c0_32 = arith.constant 0 : index
    %c0_33 = arith.constant 0 : index
    %c0_34 = arith.constant 0 : index
    %57 = vector.load %arg6[%c0_32, %c0_33, %c0_34] : memref<1x4x256xf32, #tpu.memory_space<vmem>>, vector<1x4x256xf32>
    %58 = vector.shape_cast %57 : vector<1x4x256xf32> to vector<4x256xf32>
    %59 = vector.shape_cast %56 : vector<4x256xf32> to vector<1x4x256xf32>
    tpu.vector_store %arg6[%c0_32, %c0_33, %c0_34], %59 {strides = array<i32>} : memref<1x4x256xf32, #tpu.memory_space<vmem>>, vector<1x4x256xf32>,
    return
  }
  func.func @transform_0(%arg0: i32) -> (i32, i32, i32) {
    %c0_i32 = arith.constant 0 : i32
    %c0_i32_0 = arith.constant 0 : i32
    %c0_i32_1 = arith.constant 0 : i32
    return %arg0, %c0_i32, %c0_i32_0 : i32, i32, i32
  }
  func.func @transform_1(%arg0: i32) -> (i32, i32) {
    %c0_i32 = arith.constant 0 : i32
    %c0_i32_0 = arith.constant 0 : i32
    %c0_i32_1 = arith.constant 0 : i32
    return %c0_i32, %c0_i32_0 : i32, i32
  }
  func.func @transform_2(%arg0: i32) -> (i32, i32) {
    %c0_i32 = arith.constant 0 : i32
    %c0_i32_0 = arith.constant 0 : i32
    %c0_i32_1 = arith.constant 0 : i32
    return %c0_i32, %c0_i32_0 : i32, i32
  }
  func.func @transform_3(%arg0: i32) -> (i32, i32) {
    %c0_i32 = arith.constant 0 : i32
    %c0_i32_0 = arith.constant 0 : i32
    %c0_i32_1 = arith.constant 0 : i32
    return %c0_i32, %c0_i32_0 : i32, i32
  }
  func.func @transform_4(%arg0: i32) -> (i32, i32) {
    %c0_i32 = arith.constant 0 : i32
    %c0_i32_0 = arith.constant 0 : i32
    %c0_i32_1 = arith.constant 0 : i32
    return %c0_i32, %c0_i32_0 : i32, i32
  }
  func.func @transform_5(%arg0: i32) -> (i32, i32, i32) {
    %c0_i32 = arith.constant 0 : i32
    %c0_i32_0 = arith.constant 0 : i32
    %c0_i32_1 = arith.constant 0 : i32
    return %arg0, %c0_i32, %c0_i32_0 : i32, i32, i32
  }
}

module attributes {stable_mosaic.version = 11 : i64} {
  func.func @kernel(%arg0: i32, %arg1: memref<1x4x64xf32, #tpu.memory_space<vmem>>, %arg2: memref<1x4x256xf32, #tpu.memory_space<vmem>>, %arg3: memref<4x4xf32, #tpu.memory_space<vmem>>, %arg4: memref<4x1xf32, #tpu.memory_space<vmem>>, %arg5: memref<64x256xf32, #tpu.memory_space<vmem>>, %arg6: memref<9x256xf32, #tpu.memory_space<vmem>>, %arg7: memref<4x72xf32, #tpu.memory_space<vmem>>, %arg8: memref<4x1xf32, #tpu.memory_space<vmem>>, %arg9: memref<4x1xf32, #tpu.memory_space<vmem>>, %arg10: memref<1x4x256xf32, #tpu.memory_space<vmem>>, %arg11: memref<72x256xf32, #tpu.memory_space<vmem>>) attributes {dimension_semantics = [#tpu.dimension_semantics<parallel>], iteration_bounds = array<i64: 2>, scalar_prefetch = 0 : i64, scratch_operands = 1 : i64, tpu.core_type = #tpu.core_type<tc>, window_params = [{transform_indices = @transform_0, window_bounds = array<i64: 1, 4, 64>}, {transform_indices = @transform_1, window_bounds = array<i64: 1, 4, 256>}, {pipeline_mode = #tpu.pipeline_mode<synchronous>, transform_indices = @transform_2, window_bounds = array<i64: 4, 4>}, {pipeline_mode = #tpu.pipeline_mode<synchronous>, transform_indices = @transform_3, window_bounds = array<i64: 4, 1>}, {pipeline_mode = #tpu.pipeline_mode<synchronous>, transform_indices = @transform_4, window_bounds = array<i64: 64, 256>}, {pipeline_mode = #tpu.pipeline_mode<synchronous>, transform_indices = @transform_5, window_bounds = array<i64: 9, 256>}, {pipeline_mode = #tpu.pipeline_mode<synchronous>, transform_indices = @transform_6, window_bounds = array<i64: 4, 72>}, {pipeline_mode = #tpu.pipeline_mode<synchronous>, transform_indices = @transform_7, window_bounds = array<i64: 4, 1>}, {pipeline_mode = #tpu.pipeline_mode<synchronous>, transform_indices = @transform_8, window_bounds = array<i64: 4, 1>}, {transform_indices = @transform_9, window_bounds = array<i64: 1, 4, 256>}]} {
    %c0 = arith.constant 0 : index
    %c0_0 = arith.constant 0 : index
    %0 = vector.load %arg3[%c0, %c0_0] : memref<4x4xf32, #tpu.memory_space<vmem>>, vector<4x4xf32>
    %c0_1 = arith.constant 0 : index
    %c0_2 = arith.constant 0 : index
    %c0_3 = arith.constant 0 : index
    %1 = vector.load %arg1[%c0_1, %c0_2, %c0_3] : memref<1x4x64xf32, #tpu.memory_space<vmem>>, vector<1x4x64xf32>
    %2 = vector.shape_cast %1 : vector<1x4x64xf32> to vector<4x64xf32>
    %cst = arith.constant dense<0.000000e+00> : vector<4x64xf32>
    %3 = tpu.matmul %0, %2, %cst {dimension_numbers = #tpu.dot_dimension_numbers<[1], [0], [0], [1], [0, 0, 1, 1], [], []>} : vector<4x4xf32>, vector<4x64xf32>, vector<4x64xf32> -> vector<4x64xf32>
    %c0_4 = arith.constant 0 : index
    %c0_5 = arith.constant 0 : index
    %4 = vector.load %arg4[%c0_4, %c0_5] : memref<4x1xf32, #tpu.memory_space<vmem>>, vector<4x1xf32>
    %5 = vector.broadcast %4 : vector<4x1xf32> to vector<4x64xf32>
    %6 = arith.addf %3, %5 : vector<4x64xf32>
    %c0_6 = arith.constant 0 : index
    %c0_7 = arith.constant 0 : index
    %7 = vector.load %arg5[%c0_6, %c0_7] : memref<64x256xf32, #tpu.memory_space<vmem>>, vector<64x256xf32>
    %cst_8 = arith.constant dense<0.000000e+00> : vector<4x256xf32>
    %8 = tpu.matmul %6, %7, %cst_8 {dimension_numbers = #tpu.dot_dimension_numbers<[1], [0], [0], [1], [0, 0, 1, 1], [], []>} : vector<4x64xf32>, vector<64x256xf32>, vector<4x256xf32> -> vector<4x256xf32>
    %c0_9 = arith.constant 0 : index
    %c0_10 = arith.constant 0 : index
    %c0_11 = arith.constant 0 : index
    %9 = vector.load %arg2[%c0_9, %c0_10, %c0_11] : memref<1x4x256xf32, #tpu.memory_space<vmem>>, vector<1x4x256xf32>
    %10 = vector.shape_cast %9 : vector<1x4x256xf32> to vector<4x256xf32>
    %c0_12 = arith.constant 0 : index
    %c0_13 = arith.constant 0 : index
    %11 = vector.load %arg6[%c0_12, %c0_13] : memref<9x256xf32, #tpu.memory_space<vmem>>, vector<1x256xf32>
    %c17_i32 = arith.constant 17 : i32
    %12 = tpu.dynamic_rotate %10 by %c17_i32 dim 1 : vector<4x256xf32>, i32 -> vector<4x256xf32>
    %13 = vector.broadcast %11 : vector<1x256xf32> to vector<4x256xf32>
    %14 = arith.mulf %12, %13 : vector<4x256xf32>
    %c0_14 = arith.constant 0 : index
    %c0_15 = arith.constant 0 : index
    %15 = vector.load %arg11[%c0_14, %c0_15] : memref<72x256xf32, #tpu.memory_space<vmem>>, vector<4x256xf32>
    tpu.vector_store %arg11[%c0_14, %c0_15], %14 {strides = array<i32>} : memref<72x256xf32, #tpu.memory_space<vmem>>, vector<4x256xf32>,
    %c17_i32_16 = arith.constant 17 : i32
    %16 = tpu.dynamic_rotate %8 by %c17_i32_16 dim 1 : vector<4x256xf32>, i32 -> vector<4x256xf32>
    %17 = vector.broadcast %11 : vector<1x256xf32> to vector<4x256xf32>
    %18 = arith.mulf %16, %17 : vector<4x256xf32>
    %c4 = arith.constant 4 : index
    %c0_17 = arith.constant 0 : index
    %19 = vector.load %arg11[%c4, %c0_17] : memref<72x256xf32, #tpu.memory_space<vmem>>, vector<4x256xf32>
    tpu.vector_store %arg11[%c4, %c0_17], %18 {strides = array<i32>} : memref<72x256xf32, #tpu.memory_space<vmem>>, vector<4x256xf32>,
    %c1 = arith.constant 1 : index
    %c0_18 = arith.constant 0 : index
    %20 = vector.load %arg6[%c1, %c0_18] : memref<9x256xf32, #tpu.memory_space<vmem>>, vector<1x256xf32>
    %c16_i32 = arith.constant 16 : i32
    %21 = tpu.dynamic_rotate %10 by %c16_i32 dim 1 : vector<4x256xf32>, i32 -> vector<4x256xf32>
    %22 = vector.broadcast %20 : vector<1x256xf32> to vector<4x256xf32>
    %23 = arith.mulf %21, %22 : vector<4x256xf32>
    %c8 = arith.constant 8 : index
    %c0_19 = arith.constant 0 : index
    %24 = vector.load %arg11[%c8, %c0_19] : memref<72x256xf32, #tpu.memory_space<vmem>>, vector<4x256xf32>
    tpu.vector_store %arg11[%c8, %c0_19], %23 {strides = array<i32>} : memref<72x256xf32, #tpu.memory_space<vmem>>, vector<4x256xf32>,
    %c16_i32_20 = arith.constant 16 : i32
    %25 = tpu.dynamic_rotate %8 by %c16_i32_20 dim 1 : vector<4x256xf32>, i32 -> vector<4x256xf32>
    %26 = vector.broadcast %20 : vector<1x256xf32> to vector<4x256xf32>
    %27 = arith.mulf %25, %26 : vector<4x256xf32>
    %c12 = arith.constant 12 : index
    %c0_21 = arith.constant 0 : index
    %28 = vector.load %arg11[%c12, %c0_21] : memref<72x256xf32, #tpu.memory_space<vmem>>, vector<4x256xf32>
    tpu.vector_store %arg11[%c12, %c0_21], %27 {strides = array<i32>} : memref<72x256xf32, #tpu.memory_space<vmem>>, vector<4x256xf32>,
    %c2 = arith.constant 2 : index
    %c0_22 = arith.constant 0 : index
    %29 = vector.load %arg6[%c2, %c0_22] : memref<9x256xf32, #tpu.memory_space<vmem>>, vector<1x256xf32>
    %c15_i32 = arith.constant 15 : i32
    %30 = tpu.dynamic_rotate %10 by %c15_i32 dim 1 : vector<4x256xf32>, i32 -> vector<4x256xf32>
    %31 = vector.broadcast %29 : vector<1x256xf32> to vector<4x256xf32>
    %32 = arith.mulf %30, %31 : vector<4x256xf32>
    %c16 = arith.constant 16 : index
    %c0_23 = arith.constant 0 : index
    %33 = vector.load %arg11[%c16, %c0_23] : memref<72x256xf32, #tpu.memory_space<vmem>>, vector<4x256xf32>
    tpu.vector_store %arg11[%c16, %c0_23], %32 {strides = array<i32>} : memref<72x256xf32, #tpu.memory_space<vmem>>, vector<4x256xf32>,
    %c15_i32_24 = arith.constant 15 : i32
    %34 = tpu.dynamic_rotate %8 by %c15_i32_24 dim 1 : vector<4x256xf32>, i32 -> vector<4x256xf32>
    %35 = vector.broadcast %29 : vector<1x256xf32> to vector<4x256xf32>
    %36 = arith.mulf %34, %35 : vector<4x256xf32>
    %c20 = arith.constant 20 : index
    %c0_25 = arith.constant 0 : index
    %37 = vector.load %arg11[%c20, %c0_25] : memref<72x256xf32, #tpu.memory_space<vmem>>, vector<4x256xf32>
    tpu.vector_store %arg11[%c20, %c0_25], %36 {strides = array<i32>} : memref<72x256xf32, #tpu.memory_space<vmem>>, vector<4x256xf32>,
    %c3 = arith.constant 3 : index
    %c0_26 = arith.constant 0 : index
    %38 = vector.load %arg6[%c3, %c0_26] : memref<9x256xf32, #tpu.memory_space<vmem>>, vector<1x256xf32>
    %c1_i32 = arith.constant 1 : i32
    %39 = tpu.dynamic_rotate %10 by %c1_i32 dim 1 : vector<4x256xf32>, i32 -> vector<4x256xf32>
    %40 = vector.broadcast %38 : vector<1x256xf32> to vector<4x256xf32>
    %41 = arith.mulf %39, %40 : vector<4x256xf32>
    %c24 = arith.constant 24 : index
    %c0_27 = arith.constant 0 : index
    %42 = vector.load %arg11[%c24, %c0_27] : memref<72x256xf32, #tpu.memory_space<vmem>>, vector<4x256xf32>
    tpu.vector_store %arg11[%c24, %c0_27], %41 {strides = array<i32>} : memref<72x256xf32, #tpu.memory_space<vmem>>, vector<4x256xf32>,
    %c1_i32_28 = arith.constant 1 : i32
    %43 = tpu.dynamic_rotate %8 by %c1_i32_28 dim 1 : vector<4x256xf32>, i32 -> vector<4x256xf32>
    %44 = vector.broadcast %38 : vector<1x256xf32> to vector<4x256xf32>
    %45 = arith.mulf %43, %44 : vector<4x256xf32>
    %c28 = arith.constant 28 : index
    %c0_29 = arith.constant 0 : index
    %46 = vector.load %arg11[%c28, %c0_29] : memref<72x256xf32, #tpu.memory_space<vmem>>, vector<4x256xf32>
    tpu.vector_store %arg11[%c28, %c0_29], %45 {strides = array<i32>} : memref<72x256xf32, #tpu.memory_space<vmem>>, vector<4x256xf32>,
    %c32 = arith.constant 32 : index
    %c0_30 = arith.constant 0 : index
    %47 = vector.load %arg11[%c32, %c0_30] : memref<72x256xf32, #tpu.memory_space<vmem>>, vector<4x256xf32>
    tpu.vector_store %arg11[%c32, %c0_30], %10 {strides = array<i32>} : memref<72x256xf32, #tpu.memory_space<vmem>>, vector<4x256xf32>,
    %c36 = arith.constant 36 : index
    %c0_31 = arith.constant 0 : index
    %48 = vector.load %arg11[%c36, %c0_31] : memref<72x256xf32, #tpu.memory_space<vmem>>, vector<4x256xf32>
    tpu.vector_store %arg11[%c36, %c0_31], %8 {strides = array<i32>} : memref<72x256xf32, #tpu.memory_space<vmem>>, vector<4x256xf32>,
    %c5 = arith.constant 5 : index
    %c0_32 = arith.constant 0 : index
    %49 = vector.load %arg6[%c5, %c0_32] : memref<9x256xf32, #tpu.memory_space<vmem>>, vector<1x256xf32>
    %c255_i32 = arith.constant 255 : i32
    %50 = tpu.dynamic_rotate %10 by %c255_i32 dim 1 : vector<4x256xf32>, i32 -> vector<4x256xf32>
    %51 = vector.broadcast %49 : vector<1x256xf32> to vector<4x256xf32>
    %52 = arith.mulf %50, %51 : vector<4x256xf32>
    %c40 = arith.constant 40 : index
    %c0_33 = arith.constant 0 : index
    %53 = vector.load %arg11[%c40, %c0_33] : memref<72x256xf32, #tpu.memory_space<vmem>>, vector<4x256xf32>
    tpu.vector_store %arg11[%c40, %c0_33], %52 {strides = array<i32>} : memref<72x256xf32, #tpu.memory_space<vmem>>, vector<4x256xf32>,
    %c255_i32_34 = arith.constant 255 : i32
    %54 = tpu.dynamic_rotate %8 by %c255_i32_34 dim 1 : vector<4x256xf32>, i32 -> vector<4x256xf32>
    %55 = vector.broadcast %49 : vector<1x256xf32> to vector<4x256xf32>
    %56 = arith.mulf %54, %55 : vector<4x256xf32>
    %c44 = arith.constant 44 : index
    %c0_35 = arith.constant 0 : index
    %57 = vector.load %arg11[%c44, %c0_35] : memref<72x256xf32, #tpu.memory_space<vmem>>, vector<4x256xf32>
    tpu.vector_store %arg11[%c44, %c0_35], %56 {strides = array<i32>} : memref<72x256xf32, #tpu.memory_space<vmem>>, vector<4x256xf32>,
    %c6 = arith.constant 6 : index
    %c0_36 = arith.constant 0 : index
    %58 = vector.load %arg6[%c6, %c0_36] : memref<9x256xf32, #tpu.memory_space<vmem>>, vector<1x256xf32>
    %c241_i32 = arith.constant 241 : i32
    %59 = tpu.dynamic_rotate %10 by %c241_i32 dim 1 : vector<4x256xf32>, i32 -> vector<4x256xf32>
    %60 = vector.broadcast %58 : vector<1x256xf32> to vector<4x256xf32>
    %61 = arith.mulf %59, %60 : vector<4x256xf32>
    %c48 = arith.constant 48 : index
    %c0_37 = arith.constant 0 : index
    %62 = vector.load %arg11[%c48, %c0_37] : memref<72x256xf32, #tpu.memory_space<vmem>>, vector<4x256xf32>
    tpu.vector_store %arg11[%c48, %c0_37], %61 {strides = array<i32>} : memref<72x256xf32, #tpu.memory_space<vmem>>, vector<4x256xf32>,
    %c241_i32_38 = arith.constant 241 : i32
    %63 = tpu.dynamic_rotate %8 by %c241_i32_38 dim 1 : vector<4x256xf32>, i32 -> vector<4x256xf32>
    %64 = vector.broadcast %58 : vector<1x256xf32> to vector<4x256xf32>
    %65 = arith.mulf %63, %64 : vector<4x256xf32>
    %c52 = arith.constant 52 : index
    %c0_39 = arith.constant 0 : index
    %66 = vector.load %arg11[%c52, %c0_39] : memref<72x256xf32, #tpu.memory_space<vmem>>, vector<4x256xf32>
    tpu.vector_store %arg11[%c52, %c0_39], %65 {strides = array<i32>} : memref<72x256xf32, #tpu.memory_space<vmem>>, vector<4x256xf32>,
    %c7 = arith.constant 7 : index
    %c0_40 = arith.constant 0 : index
    %67 = vector.load %arg6[%c7, %c0_40] : memref<9x256xf32, #tpu.memory_space<vmem>>, vector<1x256xf32>
    %c240_i32 = arith.constant 240 : i32
    %68 = tpu.dynamic_rotate %10 by %c240_i32 dim 1 : vector<4x256xf32>, i32 -> vector<4x256xf32>
    %69 = vector.broadcast %67 : vector<1x256xf32> to vector<4x256xf32>
    %70 = arith.mulf %68, %69 : vector<4x256xf32>
    %c56 = arith.constant 56 : index
    %c0_41 = arith.constant 0 : index
    %71 = vector.load %arg11[%c56, %c0_41] : memref<72x256xf32, #tpu.memory_space<vmem>>, vector<4x256xf32>
    tpu.vector_store %arg11[%c56, %c0_41], %70 {strides = array<i32>} : memref<72x256xf32, #tpu.memory_space<vmem>>, vector<4x256xf32>,
    %c240_i32_42 = arith.constant 240 : i32
    %72 = tpu.dynamic_rotate %8 by %c240_i32_42 dim 1 : vector<4x256xf32>, i32 -> vector<4x256xf32>
    %73 = vector.broadcast %67 : vector<1x256xf32> to vector<4x256xf32>
    %74 = arith.mulf %72, %73 : vector<4x256xf32>
    %c60 = arith.constant 60 : index
    %c0_43 = arith.constant 0 : index
    %75 = vector.load %arg11[%c60, %c0_43] : memref<72x256xf32, #tpu.memory_space<vmem>>, vector<4x256xf32>
    tpu.vector_store %arg11[%c60, %c0_43], %74 {strides = array<i32>} : memref<72x256xf32, #tpu.memory_space<vmem>>, vector<4x256xf32>,
    %c8_44 = arith.constant 8 : index
    %c0_45 = arith.constant 0 : index
    %76 = vector.load %arg6[%c8_44, %c0_45] : memref<9x256xf32, #tpu.memory_space<vmem>>, vector<1x256xf32>
    %c239_i32 = arith.constant 239 : i32
    %77 = tpu.dynamic_rotate %10 by %c239_i32 dim 1 : vector<4x256xf32>, i32 -> vector<4x256xf32>
    %78 = vector.broadcast %76 : vector<1x256xf32> to vector<4x256xf32>
    %79 = arith.mulf %77, %78 : vector<4x256xf32>
    %c64 = arith.constant 64 : index
    %c0_46 = arith.constant 0 : index
    %80 = vector.load %arg11[%c64, %c0_46] : memref<72x256xf32, #tpu.memory_space<vmem>>, vector<4x256xf32>
    tpu.vector_store %arg11[%c64, %c0_46], %79 {strides = array<i32>} : memref<72x256xf32, #tpu.memory_space<vmem>>, vector<4x256xf32>,
    %c239_i32_47 = arith.constant 239 : i32
    %81 = tpu.dynamic_rotate %8 by %c239_i32_47 dim 1 : vector<4x256xf32>, i32 -> vector<4x256xf32>
    %82 = vector.broadcast %76 : vector<1x256xf32> to vector<4x256xf32>
    %83 = arith.mulf %81, %82 : vector<4x256xf32>
    %c68 = arith.constant 68 : index
    %c0_48 = arith.constant 0 : index
    %84 = vector.load %arg11[%c68, %c0_48] : memref<72x256xf32, #tpu.memory_space<vmem>>, vector<4x256xf32>
    tpu.vector_store %arg11[%c68, %c0_48], %83 {strides = array<i32>} : memref<72x256xf32, #tpu.memory_space<vmem>>, vector<4x256xf32>,
    %c0_49 = arith.constant 0 : index
    %c0_50 = arith.constant 0 : index
    %85 = vector.load %arg7[%c0_49, %c0_50] : memref<4x72xf32, #tpu.memory_space<vmem>>, vector<4x72xf32>
    %c0_51 = arith.constant 0 : index
    %c0_52 = arith.constant 0 : index
    %86 = vector.load %arg11[%c0_51, %c0_52] : memref<72x256xf32, #tpu.memory_space<vmem>>, vector<72x256xf32>
    %cst_53 = arith.constant dense<0.000000e+00> : vector<4x256xf32>
    %87 = tpu.matmul %85, %86, %cst_53 {dimension_numbers = #tpu.dot_dimension_numbers<[1], [0], [0], [1], [0, 0, 1, 1], [], []>} : vector<4x72xf32>, vector<72x256xf32>, vector<4x256xf32> -> vector<4x256xf32>
    %c0_54 = arith.constant 0 : index
    %c0_55 = arith.constant 0 : index
    %88 = vector.load %arg8[%c0_54, %c0_55] : memref<4x1xf32, #tpu.memory_space<vmem>>, vector<4x1xf32>
    %89 = vector.broadcast %88 : vector<4x1xf32> to vector<4x256xf32>
    %90 = arith.mulf %87, %89 : vector<4x256xf32>
    %c0_56 = arith.constant 0 : index
    %c0_57 = arith.constant 0 : index
    %91 = vector.load %arg9[%c0_56, %c0_57] : memref<4x1xf32, #tpu.memory_space<vmem>>, vector<4x1xf32>
    %92 = vector.broadcast %91 : vector<4x1xf32> to vector<4x256xf32>
    %93 = arith.addf %90, %92 : vector<4x256xf32>
    %cst_58 = arith.constant 0.000000e+00 : f32
    %94 = vector.broadcast %cst_58 : f32 to vector<4x256xf32>
    %95 = arith.cmpf oge, %93, %94 : vector<4x256xf32>
    %cst_59 = arith.constant 0.00999999977 : f32
    %96 = vector.broadcast %cst_59 : f32 to vector<4x256xf32>
    %97 = arith.mulf %96, %93 : vector<4x256xf32>
    %98 = arith.select %95, %93, %97 : vector<4x256xi1>, vector<4x256xf32>
    %c0_60 = arith.constant 0 : index
    %c0_61 = arith.constant 0 : index
    %c0_62 = arith.constant 0 : index
    %99 = vector.load %arg10[%c0_60, %c0_61, %c0_62] : memref<1x4x256xf32, #tpu.memory_space<vmem>>, vector<1x4x256xf32>
    %100 = vector.shape_cast %99 : vector<1x4x256xf32> to vector<4x256xf32>
    %101 = vector.shape_cast %98 : vector<4x256xf32> to vector<1x4x256xf32>
    tpu.vector_store %arg10[%c0_60, %c0_61, %c0_62], %101 {strides = array<i32>} : memref<1x4x256xf32, #tpu.memory_space<vmem>>, vector<1x4x256xf32>,
    return
  }
  func.func @transform_0(%arg0: i32) -> (i32, i32, i32) {
    %c0_i32 = arith.constant 0 : i32
    %c0_i32_0 = arith.constant 0 : i32
    %c0_i32_1 = arith.constant 0 : i32
    return %arg0, %c0_i32, %c0_i32_0 : i32, i32, i32
  }
  func.func @transform_1(%arg0: i32) -> (i32, i32, i32) {
    %c0_i32 = arith.constant 0 : i32
    %c0_i32_0 = arith.constant 0 : i32
    %c0_i32_1 = arith.constant 0 : i32
    return %arg0, %c0_i32, %c0_i32_0 : i32, i32, i32
  }
  func.func @transform_2(%arg0: i32) -> (i32, i32) {
    %c0_i32 = arith.constant 0 : i32
    %c0_i32_0 = arith.constant 0 : i32
    %c0_i32_1 = arith.constant 0 : i32
    return %c0_i32, %c0_i32_0 : i32, i32
  }
  func.func @transform_3(%arg0: i32) -> (i32, i32) {
    %c0_i32 = arith.constant 0 : i32
    %c0_i32_0 = arith.constant 0 : i32
    %c0_i32_1 = arith.constant 0 : i32
    return %c0_i32, %c0_i32_0 : i32, i32
  }
  func.func @transform_4(%arg0: i32) -> (i32, i32) {
    %c0_i32 = arith.constant 0 : i32
    %c0_i32_0 = arith.constant 0 : i32
    %c0_i32_1 = arith.constant 0 : i32
    return %c0_i32, %c0_i32_0 : i32, i32
  }
  func.func @transform_5(%arg0: i32) -> (i32, i32) {
    %c0_i32 = arith.constant 0 : i32
    %c0_i32_0 = arith.constant 0 : i32
    %c0_i32_1 = arith.constant 0 : i32
    return %c0_i32, %c0_i32_0 : i32, i32
  }
  func.func @transform_6(%arg0: i32) -> (i32, i32) {
    %c0_i32 = arith.constant 0 : i32
    %c0_i32_0 = arith.constant 0 : i32
    %c0_i32_1 = arith.constant 0 : i32
    return %c0_i32, %c0_i32_0 : i32, i32
  }
  func.func @transform_7(%arg0: i32) -> (i32, i32) {
    %c0_i32 = arith.constant 0 : i32
    %c0_i32_0 = arith.constant 0 : i32
    %c0_i32_1 = arith.constant 0 : i32
    return %c0_i32, %c0_i32_0 : i32, i32
  }
  func.func @transform_8(%arg0: i32) -> (i32, i32) {
    %c0_i32 = arith.constant 0 : i32
    %c0_i32_0 = arith.constant 0 : i32
    %c0_i32_1 = arith.constant 0 : i32
    return %c0_i32, %c0_i32_0 : i32, i32
  }
  func.func @transform_9(%arg0: i32) -> (i32, i32, i32) {
    %c0_i32 = arith.constant 0 : i32
    %c0_i32_0 = arith.constant 0 : i32
    %c0_i32_1 = arith.constant 0 : i32
    return %arg0, %c0_i32, %c0_i32_0 : i32, i32, i32
  }
}

</mosaic_0001>

<llo_original>
// kernel: up_forward.3
$region0: #{up_forward.3}
  #allocation0 [shape = 'u32[]', space=smem, size = 0x4, offset = 0x4, fixed_abs, tag = 'smem constant byte address 0x4 - core index']
  #allocation1 [shape = 'u32[144,128]{1,0:T(1,128)}', space=vmem, size = 0x12000, scoped, tag = 'internal scratch']
  #allocation2 [shape = 'f32[36,256]{1,0:T(8,128)}', space=vmem, size = 0xa000, scoped, tag = 'scratch operand']
  %s0 = inlined_call_operand.vmem [shape: f32[2,4,256], index: 0, kind: input, shape index: {}]
  %s1 = inlined_call_operand.vmem [shape: f32[9,256], index: 1, kind: input, shape index: {}]
  %s2 = inlined_call_operand.vmem [shape: f32[4,36], index: 2, kind: input, shape index: {}]
  %s3 = inlined_call_operand.vmem [shape: f32[4,1], index: 3, kind: input, shape index: {}]
  %s4 = inlined_call_operand.vmem [shape: f32[4,1], index: 4, kind: input, shape index: {}]
  %s5 = inlined_call_operand.vmem [shape: f32[2,4,256], index: 5, kind: output, shape index: {}]
  %s6 = sld [smem:[#allocation0]]
  $region53: #{up_forward.3} parent=0
    _
  %s8 = ssub.s32 1, %s6
  %s9 = scalar_select 0, %s8, %s6
  loop: start=0, step=1, limit=4
  $region2: #{up_forward.3} parent=0 // loop_pre_header
    _
  $region3: #{up_forward.3} parent=0 // loop_header
    %s11 = sphi 0, %s15
    %p12 = scmp.ge.s32.totalorder %s11, 4
    %s21 = sphi 0, %s23
    %s24 = sphi 0, %s21
    %s25 = sphi 0, %s24
    %s41 = sphi 0, %s25
    %s45 = sphi 0, %s45
    %s47 = sphi 0, %s45
    %s48 = sphi 0, %s47
    %s62 = sphi 0, %s48
    %s66 = sphi 0, %s66
    %s68 = sphi 0, %s66
    %s69 = sphi 0, %s68
    %s83 = sphi 0, %s69
    %s87 = sphi 0, %s87
    %s89 = sphi 0, %s87
    %s90 = sphi 0, %s89
    %s104 = sphi 0, %s90
    %s108 = sphi 0, %s108
    %s110 = sphi 0, %s108
    %s111 = sphi 0, %s110
    %s125 = sphi 0, %s111
    %s131 = sphi 0, %s133
    %s134 = sphi 0, %s131
    %s135 = sphi 0, %s134
    %s151 = sphi 0, %s135
  $region4: #{up_forward.3} parent=0 // loop_header_branch
    %14 = sbr.rel (%p12) target = $region8
  $region5: #{up_forward.3} parent=0 // loop_body
    %s16 = ssub.s32 %s11, 1
    %s17 = ssub.s32 %s11, 2
    %s18 = sadd.s32 %s11, 1
    %s19 = ssub.s32 %s11, %s18
    %p20 = scmp.eq.s32.totalorder %s19, 0
    %s22 = sadd.s32 %s21, 1
    %s23 = scalar_select %p20, %s21, %s22
    %p26 = pneg %p20
    %p27 = scmp.eq.s32.totalorder %s11, 1
    %p28 = por %p26, %p27
    %p29 = scmp.ne.s32.totalorder %s21, %s24
    %p30 = scmp.eq.s32.totalorder %s11, 0
    %p31 = por %p29, %p30
    %p32 = scmp.ne.s32.totalorder %s21, %s24
    %p33 = scmp.eq.s32.totalorder %s16, 1
    %p34 = por %p32, %p33
    %p35 = scmp.ne.s32.totalorder %s24, %s25
    %p36 = scmp.eq.s32.totalorder %s16, 0
    %p37 = por %p35, %p36
    %p38 = scmp.ne.s32.totalorder %s24, %s25
    %p39 = scmp.eq.s32.totalorder %s17, 1
    %p40 = por %p38, %p39
    %p42 = scmp.ne.s32.totalorder %s25, %s41
    %p43 = scmp.eq.s32.totalorder %s17, 0
    %p44 = por %p42, %p43
    %s46 = sadd.s32 %s45, 1
    %p49 = scmp.eq.s32.totalorder %s11, 1
    %p50 = scmp.ne.s32.totalorder %s45, %s47
    %p51 = scmp.eq.s32.totalorder %s11, 0
    %p52 = por %p50, %p51
    %p53 = scmp.ne.s32.totalorder %s45, %s47
    %p54 = scmp.eq.s32.totalorder %s16, 1
    %p55 = por %p53, %p54
    %p56 = scmp.ne.s32.totalorder %s47, %s48
    %p57 = scmp.eq.s32.totalorder %s16, 0
    %p58 = por %p56, %p57
    %p59 = scmp.ne.s32.totalorder %s47, %s48
    %p60 = scmp.eq.s32.totalorder %s17, 1
    %p61 = por %p59, %p60
    %p63 = scmp.ne.s32.totalorder %s48, %s62
    %p64 = scmp.eq.s32.totalorder %s17, 0
    %p65 = por %p63, %p64
    %s67 = sadd.s32 %s66, 1
    %p70 = scmp.eq.s32.totalorder %s11, 1
    %p71 = scmp.ne.s32.totalorder %s66, %s68
    %p72 = scmp.eq.s32.totalorder %s11, 0
    %p73 = por %p71, %p72
    %p74 = scmp.ne.s32.totalorder %s66, %s68
    %p75 = scmp.eq.s32.totalorder %s16, 1
    %p76 = por %p74, %p75
    %p77 = scmp.ne.s32.totalorder %s68, %s69
    %p78 = scmp.eq.s32.totalorder %s16, 0
    %p79 = por %p77, %p78
    %p80 = scmp.ne.s32.totalorder %s68, %s69
    %p81 = scmp.eq.s32.totalorder %s17, 1
    %p82 = por %p80, %p81
    %p84 = scmp.ne.s32.totalorder %s69, %s83
    %p85 = scmp.eq.s32.totalorder %s17, 0
    %p86 = por %p84, %p85
    %s88 = sadd.s32 %s87, 1
    %p91 = scmp.eq.s32.totalorder %s11, 1
    %p92 = scmp.ne.s32.totalorder %s87, %s89
    %p93 = scmp.eq.s32.totalorder %s11, 0
    %p94 = por %p92, %p93
    %p95 = scmp.ne.s32.totalorder %s87, %s89
    %p96 = scmp.eq.s32.totalorder %s16, 1
    %p97 = por %p95, %p96
    %p98 = scmp.ne.s32.totalorder %s89, %s90
    %p99 = scmp.eq.s32.totalorder %s16, 0
    %p100 = por %p98, %p99
    %p101 = scmp.ne.s32.totalorder %s89, %s90
    %p102 = scmp.eq.s32.totalorder %s17, 1
    %p103 = por %p101, %p102
    %p105 = scmp.ne.s32.totalorder %s90, %s104
    %p106 = scmp.eq.s32.totalorder %s17, 0
    %p107 = por %p105, %p106
    %s109 = sadd.s32 %s108, 1
    %p112 = scmp.eq.s32.totalorder %s11, 1
    %p113 = scmp.ne.s32.totalorder %s108, %s110
    %p114 = scmp.eq.s32.totalorder %s11, 0
    %p115 = por %p113, %p114
    %p116 = scmp.ne.s32.totalorder %s108, %s110
    %p117 = scmp.eq.s32.totalorder %s16, 1
    %p118 = por %p116, %p117
    %p119 = scmp.ne.s32.totalorder %s110, %s111
    %p120 = scmp.eq.s32.totalorder %s16, 0
    %p121 = por %p119, %p120
    %p122 = scmp.ne.s32.totalorder %s110, %s111
    %p123 = scmp.eq.s32.totalorder %s17, 1
    %p124 = por %p122, %p123
    %p126 = scmp.ne.s32.totalorder %s111, %s125
    %p127 = scmp.eq.s32.totalorder %s17, 0
    %p128 = por %p126, %p127
    %s129 = ssub.s32 %s11, %s18
    %p130 = scmp.eq.s32.totalorder %s129, 0
    %s132 = sadd.s32 %s131, 1
    %s133 = scalar_select %p130, %s131, %s132
    %p136 = pneg %p130
    %p137 = scmp.eq.s32.totalorder %s11, 1
    %p138 = por %p136, %p137
    %p139 = scmp.ne.s32.totalorder %s131, %s134
    %p140 = scmp.eq.s32.totalorder %s11, 0
    %p141 = por %p139, %p140
    %p142 = scmp.ne.s32.totalorder %s131, %s134
    %p143 = scmp.eq.s32.totalorder %s16, 1
    %p144 = por %p142, %p143
    %p145 = scmp.ne.s32.totalorder %s134, %s135
    %p146 = scmp.eq.s32.totalorder %s16, 0
    %p147 = por %p145, %p146
    %p148 = scmp.ne.s32.totalorder %s134, %s135
    %p149 = scmp.eq.s32.totalorder %s17, 1
    %p150 = por %p148, %p149
    %p152 = scmp.ne.s32.totalorder %s135, %s151
    %p153 = scmp.eq.s32.totalorder %s17, 0
    %p154 = por %p152, %p153
    %p155 = scmp.le.s32.totalorder 1, %s11
    %p156 = scmp.lt.s32.totalorder %s11, 3
    %p157 = pnand %p155, %p156
    %p158 = pneg %p157
    // Predicated region
    $region9: #{up_forward.3} parent=5 // pred_check
      _
    $region10: #{up_forward.3} parent=5 // pred_check_branch
      %160 = sbr.rel (%p157) target = $region12
    $region11: #{up_forward.3} parent=5 // pred_region
      %s161 = ssub.s32 %s11, 1
      // Predicated region
      $region13: #{up_forward.3} parent=11 // pred_check
        %p162 = pneg %p58
      $region14: #{up_forward.3} parent=11 // pred_check_branch
        %164 = sbr.rel (%p162) target = $region16
      $region15: #{up_forward.3} parent=11 // pred_region
        _
      $region16: #{up_forward.3} parent=11 // pred_fallthru
        _
      // Predicated region
      $region17: #{up_forward.3} parent=11 // pred_check
        %p165 = pneg %p79
      $region18: #{up_forward.3} parent=11 // pred_check_branch
        %167 = sbr.rel (%p165) target = $region20
      $region19: #{up_forward.3} parent=11 // pred_region
        _
      $region20: #{up_forward.3} parent=11 // pred_fallthru
        _
      // Predicated region
      $region21: #{up_forward.3} parent=11 // pred_check
        %p168 = pneg %p100
      $region22: #{up_forward.3} parent=11 // pred_check_branch
        %170 = sbr.rel (%p168) target = $region24
      $region23: #{up_forward.3} parent=11 // pred_region
        _
      $region24: #{up_forward.3} parent=11 // pred_fallthru
        _
      // Predicated region
      $region25: #{up_forward.3} parent=11 // pred_check
        %p171 = pneg %p121
      $region26: #{up_forward.3} parent=11 // pred_check_branch
        %173 = sbr.rel (%p171) target = $region28
      $region27: #{up_forward.3} parent=11 // pred_region
        _
      $region28: #{up_forward.3} parent=11 // pred_fallthru
        _
    $region12: #{up_forward.3} parent=5 // pred_fallthru
      _
    %p174 = scmp.lt.s32.totalorder %s11, 2
    // Predicated region
    $region29: #{up_forward.3} parent=5 // pred_check
      %p175 = pneg %p174
    $region30: #{up_forward.3} parent=5 // pred_check_branch
      %177 = sbr.rel (%p175) target = $region32
    $region31: #{up_forward.3} parent=5 // pred_region
      // Predicated region
      $region33: #{up_forward.3} parent=31 // pred_check
        %p178 = pneg %p31
      $region34: #{up_forward.3} parent=31 // pred_check_branch
        %180 = sbr.rel (%p178) target = $region36
      $region35: #{up_forward.3} parent=31 // pred_region
        %p181 = scmp.lt.s32.totalorder %s11, 1
        %s182 = scalar_select %p181, %s11, 1
        %s183 = smul.addr %s182, 2
        %s184 = smul.addr %s183, 4
        %s185 = scalar_lea.vmem %s0, %s184
      $region36: #{up_forward.3} parent=31 // pred_fallthru
        _
    $region32: #{up_forward.3} parent=5 // pred_fallthru
      _
    %p186 = scmp.le.s32.totalorder 1, %s11
    %p187 = scmp.lt.s32.totalorder %s11, 3
    %p188 = pnand %p186, %p187
    %p189 = pneg %p188
    // Predicated region
    $region37: #{up_forward.3} parent=5 // pred_check
      _
    $region38: #{up_forward.3} parent=5 // pred_check_branch
      %191 = sbr.rel (%p188) target = $region40
    $region39: #{up_forward.3} parent=5 // pred_region
      %s192 = ssub.s32 %s11, 1
      %p193 = scmp.lt.s32.totalorder %s16, 1
      %s194 = scalar_select %p193, %s16, 1
      %s195 = smul.addr %s194, 2
      %s196 = smul.addr %s195, 4
      %s197 = scalar_lea.vmem %s0, %s196
      %p198 = pneg %p37
      %p199 = pneg %p34
      %p200 = pneg %p58
      %p201 = pneg %p55
      %p202 = pneg %p79
      %p203 = pneg %p76
      %p204 = pneg %p100
      %p205 = pneg %p97
      %p206 = pneg %p121
      %p207 = pneg %p118
      %p208 = pneg %p147
      %p209 = pneg %p144
      %p210 = scmp.lt.s32.totalorder %s16, 1
      %s211 = scalar_select %p210, %s16, 1
      %s212 = smul.addr %s211, 2
      %s213 = smul.addr %s212, 4
      %s214 = scalar_lea.vmem %s5, %s213
      %p215 = scmp.lt.s32.totalorder %s16, 1
      %s216 = scalar_select %p215, %s16, 1
      %s217 = smul.addr %s216, 2
      %s218 = smul.addr %s217, 4
      %s219 = scalar_lea.vmem %s0, %s218
      %p220 = scmp.lt.s32.totalorder %s16, 1
      %s221 = scalar_select %p220, %s16, 1
      %s222 = smul.addr %s221, 2
      %s223 = smul.addr %s222, 4
      %s224 = scalar_lea.vmem %s5, %s223
      %v225 = vld [vmem:[%s219] sm:$0xff]
      %v226 = vld [vmem:[%s1] ss:$8 sm:$0x3]
      %v228 = vcombine.high %v225, %v225
      %230 = vrot.lane.b32.xlu0 %v225, 17
      %v231 = vpop.permute.xlu0 %230
      %232 = vrot.lane.b32.xlu0 %v228, 17
      %v233 = vpop.permute.xlu0 %232
      %v234 = vlaneseq
      %v235 = vand.u32 %v234, 127
      %vm236 = vcmp.lt.s32.totalorder %v235, 17
      %v237 = vsel %vm236, %v231, %v233
      %v238 = vsel %vm236, %v233, %v231
      %v240 = vlaneseq
      %v241 = vshrl.u32 %v240, 7
      %v242 = vsub.s32 0, %v241
      %v243 = vrot.slane %v226, %v242
      %v244 = vlaneseq
      %v245 = vshrl.u32 %v244, 7
      %v246 = vsub.s32 1, %v245
      %v247 = vrot.slane %v226, %v246
      %v250 = vmul.f32 %v238, %v243
      %v251 = vmul.f32 %v237, %v247
      %252 = vst [vmem:[#allocation2] sm:$0xf] %v250
      %253 = vst [vmem:[#allocation2 + $0x8] sm:$0xf] %v251
      %s254 = scalar_lea.vmem %s1, 1
      %v255 = vld [vmem:[%s254] ss:$8 sm:$0x3]
      %256 = vrot.lane.b32.xlu0 %v225, 16
      %v257 = vpop.permute.xlu0 %256
      %258 = vrot.lane.b32.xlu0 %v228, 16
      %v259 = vpop.permute.xlu0 %258
      %vm260 = vcmp.lt.s32.totalorder %v235, 16
      %v261 = vsel %vm260, %v257, %v259
      %v262 = vsel %vm260, %v259, %v257
      %v264 = vlaneseq
      %v265 = vshrl.u32 %v264, 7
      %v266 = vsub.s32 0, %v265
      %v267 = vrot.slane %v255, %v266
      %v268 = vlaneseq
      %v269 = vshrl.u32 %v268, 7
      %v270 = vsub.s32 1, %v269
      %v271 = vrot.slane %v255, %v270
      %v274 = vmul.f32 %v262, %v267
      %v275 = vmul.f32 %v261, %v271
      %v278 = vrot.slane %v274, 4
      %v279 = vrot.slane %v275, 4
      %282 = vst [vmem:[#allocation2] sm:$0xf0] %v278
      %283 = vst [vmem:[#allocation2 + $0x8] sm:$0xf0] %v279
      %s284 = scalar_lea.vmem %s1, 2
      %v285 = vld [vmem:[%s284] ss:$8 sm:$0x3]
      %286 = vrot.lane.b32.xlu0 %v225, 15
      %v287 = vpop.permute.xlu0 %286
      %288 = vrot.lane.b32.xlu0 %v228, 15
      %v289 = vpop.permute.xlu0 %288
      %vm290 = vcmp.lt.s32.totalorder %v235, 15
      %v291 = vsel %vm290, %v287, %v289
      %v292 = vsel %vm290, %v289, %v287
      %v294 = vlaneseq
      %v295 = vshrl.u32 %v294, 7
      %v296 = vsub.s32 0, %v295
      %v297 = vrot.slane %v285, %v296
      %v298 = vlaneseq
      %v299 = vshrl.u32 %v298, 7
      %v300 = vsub.s32 1, %v299
      %v301 = vrot.slane %v285, %v300
      %v304 = vmul.f32 %v292, %v297
      %v305 = vmul.f32 %v291, %v301
      %306 = vst [vmem:[#allocation2 + $0x10] sm:$0xf] %v304
      %307 = vst [vmem:[#allocation2 + $0x18] sm:$0xf] %v305
      %s308 = scalar_lea.vmem %s1, 3
      %v309 = vld [vmem:[%s308] ss:$8 sm:$0x3]
      %310 = vrot.lane.b32.xlu0 %v225, 1
      %v311 = vpop.permute.xlu0 %310
      %312 = vrot.lane.b32.xlu0 %v228, 1
      %v313 = vpop.permute.xlu0 %312
      %vm314 = vcmp.lt.s32.totalorder %v235, 1
      %v315 = vsel %vm314, %v311, %v313
      %v316 = vsel %vm314, %v313, %v311
      %v318 = vlaneseq
      %v319 = vshrl.u32 %v318, 7
      %v320 = vsub.s32 0, %v319
      %v321 = vrot.slane %v309, %v320
      %v322 = vlaneseq
      %v323 = vshrl.u32 %v322, 7
      %v324 = vsub.s32 1, %v323
      %v325 = vrot.slane %v309, %v324
      %v328 = vmul.f32 %v316, %v321
      %v329 = vmul.f32 %v315, %v325
      %v332 = vrot.slane %v328, 4
      %v333 = vrot.slane %v329, 4
      %336 = vst [vmem:[#allocation2 + $0x10] sm:$0xf0] %v332
      %337 = vst [vmem:[#allocation2 + $0x18] sm:$0xf0] %v333
      %338 = vst [vmem:[#allocation2 + $0x20] sm:$0xf] %v225
      %339 = vst [vmem:[#allocation2 + $0x28] sm:$0xf] %v228
      %s340 = scalar_lea.vmem %s1, 5
      %v341 = vld [vmem:[%s340] ss:$8 sm:$0x3]
      %342 = vrot.lane.b32.xlu0 %v225, 127
      %v343 = vpop.permute.xlu0 %342
      %344 = vrot.lane.b32.xlu0 %v228, 127
      %v345 = vpop.permute.xlu0 %344
      %vm346 = vcmp.lt.s32.totalorder %v235, 127
      %v347 = vsel %vm346, %v343, %v345
      %v348 = vsel %vm346, %v345, %v343
      %v350 = vlaneseq
      %v351 = vshrl.u32 %v350, 7
      %v352 = vsub.s32 0, %v351
      %v353 = vrot.slane %v341, %v352
      %v354 = vlaneseq
      %v355 = vshrl.u32 %v354, 7
      %v356 = vsub.s32 1, %v355
      %v357 = vrot.slane %v341, %v356
      %v360 = vmul.f32 %v347, %v353
      %v361 = vmul.f32 %v348, %v357
      %v364 = vrot.slane %v360, 4
      %v365 = vrot.slane %v361, 4
      %368 = vst [vmem:[#allocation2 + $0x20] sm:$0xf0] %v364
      %369 = vst [vmem:[#allocation2 + $0x28] sm:$0xf0] %v365
      %s370 = scalar_lea.vmem %s1, 6
      %v371 = vld [vmem:[%s370] ss:$8 sm:$0x3]
      %372 = vrot.lane.b32.xlu0 %v225, 113
      %v373 = vpop.permute.xlu0 %372
      %374 = vrot.lane.b32.xlu0 %v228, 113
      %v375 = vpop.permute.xlu0 %374
      %vm376 = vcmp.lt.s32.totalorder %v235, 113
      %v377 = vsel %vm376, %v373, %v375
      %v378 = vsel %vm376, %v375, %v373
      %v380 = vlaneseq
      %v381 = vshrl.u32 %v380, 7
      %v382 = vsub.s32 0, %v381
      %v383 = vrot.slane %v371, %v382
      %v384 = vlaneseq
      %v385 = vshrl.u32 %v384, 7
      %v386 = vsub.s32 1, %v385
      %v387 = vrot.slane %v371, %v386
      %v390 = vmul.f32 %v377, %v383
      %v391 = vmul.f32 %v378, %v387
      %392 = vst [vmem:[#allocation2 + $0x30] sm:$0xf] %v390
      %393 = vst [vmem:[#allocation2 + $0x38] sm:$0xf] %v391
      %s394 = scalar_lea.vmem %s1, 7
      %v395 = vld [vmem:[%s394] ss:$8 sm:$0x3]
      %396 = vrot.lane.b32.xlu0 %v225, 112
      %v397 = vpop.permute.xlu0 %396
      %398 = vrot.lane.b32.xlu0 %v228, 112
      %v399 = vpop.permute.xlu0 %398
      %vm400 = vcmp.lt.s32.totalorder %v235, 112
      %v401 = vsel %vm400, %v397, %v399
      %v402 = vsel %vm400, %v399, %v397
      %v404 = vlaneseq
      %v405 = vshrl.u32 %v404, 7
      %v406 = vsub.s32 0, %v405
      %v407 = vrot.slane %v395, %v406
      %v408 = vlaneseq
      %v409 = vshrl.u32 %v408, 7
      %v410 = vsub.s32 1, %v409
      %v411 = vrot.slane %v395, %v410
      %v414 = vmul.f32 %v401, %v407
      %v415 = vmul.f32 %v402, %v411
      %v418 = vrot.slane %v414, 4
      %v419 = vrot.slane %v415, 4
      %422 = vst [vmem:[#allocation2 + $0x30] sm:$0xf0] %v418
      %423 = vst [vmem:[#allocation2 + $0x38] sm:$0xf0] %v419
      %s424 = scalar_lea.vmem %s1, 16
      %v425 = vld [vmem:[%s424] ss:$8 sm:$0x3]
      %426 = vrot.lane.b32.xlu0 %v225, 111
      %v427 = vpop.permute.xlu0 %426
      %428 = vrot.lane.b32.xlu0 %v228, 111
      %v429 = vpop.permute.xlu0 %428
      %vm430 = vcmp.lt.s32.totalorder %v235, 111
      %v431 = vsel %vm430, %v427, %v429
      %v432 = vsel %vm430, %v429, %v427
      %v434 = vlaneseq
      %v435 = vshrl.u32 %v434, 7
      %v436 = vsub.s32 0, %v435
      %v437 = vrot.slane %v425, %v436
      %v438 = vlaneseq
      %v439 = vshrl.u32 %v438, 7
      %v440 = vsub.s32 1, %v439
      %v441 = vrot.slane %v425, %v440
      %v444 = vmul.f32 %v431, %v437
      %v445 = vmul.f32 %v432, %v441
      %446 = vst [vmem:[#allocation2 + $0x40] sm:$0xf] %v444
      %447 = vst [vmem:[#allocation2 + $0x48] sm:$0xf] %v445
      %v448 = vld [vmem:[%s2] sm:$0xf]
      %v449 = vld [vmem:[#allocation2] sm:$0xff]
      %v450 = vld [vmem:[#allocation2 + $0x8] sm:$0xff]
      %v451 = vld [vmem:[#allocation2 + $0x10] sm:$0xff]
      %v452 = vld [vmem:[#allocation2 + $0x18] sm:$0xff]
      %v453 = vld [vmem:[#allocation2 + $0x20] sm:$0xff]
      %v454 = vld [vmem:[#allocation2 + $0x28] sm:$0xff]
      %v455 = vld [vmem:[#allocation2 + $0x30] sm:$0xff]
      %v456 = vld [vmem:[#allocation2 + $0x38] sm:$0xff]
      %v457 = vld [vmem:[#allocation2 + $0x40] sm:$0xf]
      %v458 = vld [vmem:[#allocation2 + $0x48] sm:$0xf]
      %vm459 = vcmask 293888
      %v461 = vsel %vm459, %v448, 0
      %vm463 = vcmask 1043456
      %v465 = vsel %vm463, %v457, 0
      %v468 = vsel %vm463, %v458, 0
      %470 = vmatprep.subr.mxu0 %v450
      %471 = vmatpush1.msra.mxu0 %v449
      %472 = vmatprep.subr.mxu0 %v452
      %473 = vmatpush1.msra.mxu0 %v451
      %474 = vmatprep.subr.mxu0 %v454
      %475 = vmatpush1.msra.mxu0 %v453
      %476 = vmatprep.subr.mxu0 %v456
      %477 = vmatpush1.msra.mxu0 %v455
      %478 = vmatprep.subr.mxu0 %v468
      %479 = vmatpush1.msra.mxu0 %v465
      %480 = vmatprep.subr.mxu0 0.0
      %481 = vmatpush1.msra.mxu0 0.0
      %482 = vmatprep.subr.mxu0 0.0
      %483 = vmatpush1.msra.mxu0 0.0
      %484 = vmatprep.subr.mxu0 0.0
      %485 = vmatpush1.msra.mxu0 0.0
      %486 = vmatprep.subr.mxu0 0.0
      %487 = vmatpush1.msra.mxu0 0.0
      %488 = vmatprep.subr.mxu0 0.0
      %489 = vmatpush1.msra.mxu0 0.0
      %490 = vmatprep.subr.mxu0 0.0
      %491 = vmatpush1.msra.mxu0 0.0
      %492 = vmatprep.subr.mxu0 0.0
      %493 = vmatpush1.msra.mxu0 0.0
      %494 = vmatprep.subr.mxu0 0.0
      %495 = vmatpush1.msra.mxu0 0.0
      %496 = vmatprep.subr.mxu0 0.0
      %497 = vmatpush1.msra.mxu0 0.0
      %498 = vmatprep.subr.mxu0 0.0
      %499 = vmatpush1.msra.mxu0 0.0
      %500 = vmatprep.subr.mxu0 0.0
      %501 = vmatpush1.msra.mxu0 0.0
      %502 = vmatprep.subr.mxu0 0.0
      %503 = vmatpush1.msra.mxu0 0.0
      %504 = vmatprep.subr.mxu0 0.0
      %505 = vmatpush1.msra.mxu0 0.0
      %506 = vmatprep.subr.mxu0 0.0
      %507 = vmatpush1.msra.mxu0 0.0
      %508 = vmatprep.subr.mxu0 0.0
      %509 = vmatpush1.msra.mxu0 0.0
      %510 = vmatprep.subr.mxu0 0.0
      %511 = vmatpush1.msra.mxu0 0.0
      %512 = vmatprep.subr.mxu0 0.0
      %513 = vmatpush1.msra.mxu0 0.0
      %514 = vmatprep.subr.mxu0 0.0
      %515 = vmatpush1.msra.mxu0 0.0
      %516 = vmatprep.subr.mxu0 0.0
      %517 = vmatpush1.msra.mxu0 0.0
      %518 = vmatprep.subr.mxu0 0.0
      %519 = vmatpush1.msra.mxu0 0.0
      %520 = vmatprep.subr.mxu0 0.0
      %521 = vmatpush1.msra.mxu0 0.0
      %522 = vmatprep.subr.mxu0 0.0
      %523 = vmatpush1.msra.mxu0 0.0
      %524 = vmatprep.subr.mxu0 0.0
      %525 = vmatpush1.msra.mxu0 0.0
      %526 = vmatprep.subr.mxu0 0.0
      %527 = vmatpush1.msra.mxu0 0.0
      %528 = vmatprep.subr.mxu0 0.0
      %529 = vmatpush1.msra.mxu0 0.0
      %530 = vmatprep.subr.mxu0 0.0
      %531 = vmatpush1.msra.mxu0 0.0
      %532 = vmatprep.subr.mxu0 0.0
      %533 = vmatpush1.msra.mxu0 0.0
      %534 = vmatprep.mubr.f32.mxu0 0.0
      %535 = vmatmul.mubr.f32.gmra.mrb[0].mxu0 %v461
      %v536 = vpop.f32.mrb[0].mxu0
      %v537 = vadd.f32 0.0, %v536
      %v538 = vpop.f32.mrb[0].mxu0
      %v539 = vadd.f32 0.0, %v538
      %540 = vdwg.mxu0
      %v541 = vld [vmem:[%s3] sm:$0xf]
      %543 = vset.pattern.permute.xlu0 0
      %544 = vperm.xlu0 %543, %v541
      %v545 = vpop.permute.xlu0 %544
      %v547 = vmul.f32 %v537, %v545
      %v548 = vmul.f32 %v539, %v545
      %v549 = vld [vmem:[%s4] sm:$0xf]
      %551 = vset.pattern.permute.xlu0 0
      %552 = vperm.xlu0 %551, %v549
      %v553 = vpop.permute.xlu0 %552
      %v555 = vadd.f32 %v547, %v553
      %v556 = vadd.f32 %v548, %v553
      %vm557 = vcmp.ge.f32.partialorder %v555, 0.0
      %vm558 = vcmp.ge.f32.partialorder %v556, 0.0
      %v559 = vmul.f32 %v555, 0.01
      %v560 = vmul.f32 %v556, 0.01
      %v561 = vsel %vm557, %v555, %v559
      %v562 = vsel %vm558, %v556, %v560
      %v565 = vcombine.low %v561, %v562
      %567 = vst [vmem:[%s224] sm:$0xff] %v565
      %p568 = scmp.lt.s32.totalorder %s16, 1
      %s569 = scalar_select %p568, %s16, 1
      %s570 = smul.addr %s569, 2
      %s571 = smul.addr %s570, 4
      %s572 = scalar_lea.vmem %s5, %s571
      // Predicated region
      $region41: #{up_forward.3} parent=39 // pred_check
        %p573 = pneg %p144
      $region42: #{up_forward.3} parent=39 // pred_check_branch
        %575 = sbr.rel (%p573) target = $region44
      $region43: #{up_forward.3} parent=39 // pred_region
        _
      $region44: #{up_forward.3} parent=39 // pred_fallthru
        _
    $region40: #{up_forward.3} parent=5 // pred_fallthru
      _
    %p576 = scmp.le.s32.totalorder 2, %s11
    // Predicated region
    $region45: #{up_forward.3} parent=5 // pred_check
      %p577 = pneg %p576
    $region46: #{up_forward.3} parent=5 // pred_check_branch
      %579 = sbr.rel (%p577) target = $region48
    $region47: #{up_forward.3} parent=5 // pred_region
      %s580 = ssub.s32 %s11, 2
      // Predicated region
      $region49: #{up_forward.3} parent=47 // pred_check
        %p581 = pneg %p150
      $region50: #{up_forward.3} parent=47 // pred_check_branch
        %583 = sbr.rel (%p581) target = $region52
      $region51: #{up_forward.3} parent=47 // pred_region
        %p584 = scmp.lt.s32.totalorder %s17, 1
        %s585 = scalar_select %p584, %s17, 1
        %s586 = smul.addr %s585, 2
        %s587 = smul.addr %s586, 4
        %s588 = scalar_lea.vmem %s5, %s587
      $region52: #{up_forward.3} parent=47 // pred_fallthru
        _
    $region48: #{up_forward.3} parent=5 // pred_fallthru
      _
  $region6: #{up_forward.3} parent=0 // loop_footer
    %s15 = sadd.s32 1, %s11
  $region7: #{up_forward.3} parent=0 // loop_footer_branch
    %10 = sbr.rel target = $region3
  $region8: #{up_forward.3} parent=0 // loop_exit
    _

// kernel: up_forward.2
$region0: #{up_forward.2}
  #allocation0 [shape = 'u32[]', space=smem, size = 0x4, offset = 0x4, fixed_abs, tag = 'smem constant byte address 0x4 - core index']
  #allocation1 [shape = 'u32[144,128]{1,0:T(1,128)}', space=vmem, size = 0x12000, scoped, tag = 'internal scratch']
  #allocation2 [shape = 'f32[72,256]{1,0:T(8,128)}', space=vmem, size = 0x12000, scoped, tag = 'scratch operand']
  %s0 = inlined_call_operand.vmem [shape: f32[2,4,64], index: 0, kind: input, shape index: {}]
  %s1 = inlined_call_operand.vmem [shape: f32[2,4,256], index: 1, kind: input, shape index: {}]
  %s2 = inlined_call_operand.vmem [shape: f32[4,4], index: 2, kind: input, shape index: {}]
  %s3 = inlined_call_operand.vmem [shape: f32[4,1], index: 3, kind: input, shape index: {}]
  %s4 = inlined_call_operand.vmem [shape: f32[64,256], index: 4, kind: input, shape index: {}]
  %s5 = inlined_call_operand.vmem [shape: f32[9,256], index: 5, kind: input, shape index: {}]
  %s6 = inlined_call_operand.vmem [shape: f32[4,72], index: 6, kind: input, shape index: {}]
  %s7 = inlined_call_operand.vmem [shape: f32[4,1], index: 7, kind: input, shape index: {}]
  %s8 = inlined_call_operand.vmem [shape: f32[4,1], index: 8, kind: input, shape index: {}]
  %s9 = inlined_call_operand.vmem [shape: f32[2,4,256], index: 9, kind: output, shape index: {}]
  %s10 = sld [smem:[#allocation0]]
  $region69: #{up_forward.2} parent=0
    _
  %s12 = ssub.s32 1, %s10
  %s13 = scalar_select 0, %s12, %s10
  loop: start=0, step=1, limit=4
  $region2: #{up_forward.2} parent=0 // loop_pre_header
    _
  $region3: #{up_forward.2} parent=0 // loop_header
    %s15 = sphi 0, %s19
    %p16 = scmp.ge.s32.totalorder %s15, 4
    %s25 = sphi 0, %s27
    %s28 = sphi 0, %s25
    %s29 = sphi 0, %s28
    %s45 = sphi 0, %s29
    %s51 = sphi 0, %s53
    %s54 = sphi 0, %s51
    %s55 = sphi 0, %s54
    %s71 = sphi 0, %s55
    %s75 = sphi 0, %s75
    %s77 = sphi 0, %s75
    %s78 = sphi 0, %s77
    %s92 = sphi 0, %s78
    %s96 = sphi 0, %s96
    %s98 = sphi 0, %s96
    %s99 = sphi 0, %s98
    %s113 = sphi 0, %s99
    %s117 = sphi 0, %s117
    %s119 = sphi 0, %s117
    %s120 = sphi 0, %s119
    %s134 = sphi 0, %s120
    %s138 = sphi 0, %s138
    %s140 = sphi 0, %s138
    %s141 = sphi 0, %s140
    %s155 = sphi 0, %s141
    %s159 = sphi 0, %s159
    %s161 = sphi 0, %s159
    %s162 = sphi 0, %s161
    %s176 = sphi 0, %s162
    %s180 = sphi 0, %s180
    %s182 = sphi 0, %s180
    %s183 = sphi 0, %s182
    %s197 = sphi 0, %s183
    %s201 = sphi 0, %s201
    %s203 = sphi 0, %s201
    %s204 = sphi 0, %s203
    %s218 = sphi 0, %s204
    %s224 = sphi 0, %s226
    %s227 = sphi 0, %s224
    %s228 = sphi 0, %s227
    %s244 = sphi 0, %s228
  $region4: #{up_forward.2} parent=0 // loop_header_branch
    %18 = sbr.rel (%p16) target = $region8
  $region5: #{up_forward.2} parent=0 // loop_body
    %s20 = ssub.s32 %s15, 1
    %s21 = ssub.s32 %s15, 2
    %s22 = sadd.s32 %s15, 1
    %s23 = ssub.s32 %s15, %s22
    %p24 = scmp.eq.s32.totalorder %s23, 0
    %s26 = sadd.s32 %s25, 1
    %s27 = scalar_select %p24, %s25, %s26
    %p30 = pneg %p24
    %p31 = scmp.eq.s32.totalorder %s15, 1
    %p32 = por %p30, %p31
    %p33 = scmp.ne.s32.totalorder %s25, %s28
    %p34 = scmp.eq.s32.totalorder %s15, 0
    %p35 = por %p33, %p34
    %p36 = scmp.ne.s32.totalorder %s25, %s28
    %p37 = scmp.eq.s32.totalorder %s20, 1
    %p38 = por %p36, %p37
    %p39 = scmp.ne.s32.totalorder %s28, %s29
    %p40 = scmp.eq.s32.totalorder %s20, 0
    %p41 = por %p39, %p40
    %p42 = scmp.ne.s32.totalorder %s28, %s29
    %p43 = scmp.eq.s32.totalorder %s21, 1
    %p44 = por %p42, %p43
    %p46 = scmp.ne.s32.totalorder %s29, %s45
    %p47 = scmp.eq.s32.totalorder %s21, 0
    %p48 = por %p46, %p47
    %s49 = ssub.s32 %s15, %s22
    %p50 = scmp.eq.s32.totalorder %s49, 0
    %s52 = sadd.s32 %s51, 1
    %s53 = scalar_select %p50, %s51, %s52
    %p56 = pneg %p50
    %p57 = scmp.eq.s32.totalorder %s15, 1
    %p58 = por %p56, %p57
    %p59 = scmp.ne.s32.totalorder %s51, %s54
    %p60 = scmp.eq.s32.totalorder %s15, 0
    %p61 = por %p59, %p60
    %p62 = scmp.ne.s32.totalorder %s51, %s54
    %p63 = scmp.eq.s32.totalorder %s20, 1
    %p64 = por %p62, %p63
    %p65 = scmp.ne.s32.totalorder %s54, %s55
    %p66 = scmp.eq.s32.totalorder %s20, 0
    %p67 = por %p65, %p66
    %p68 = scmp.ne.s32.totalorder %s54, %s55
    %p69 = scmp.eq.s32.totalorder %s21, 1
    %p70 = por %p68, %p69
    %p72 = scmp.ne.s32.totalorder %s55, %s71
    %p73 = scmp.eq.s32.totalorder %s21, 0
    %p74 = por %p72, %p73
    %s76 = sadd.s32 %s75, 1
    %p79 = scmp.eq.s32.totalorder %s15, 1
    %p80 = scmp.ne.s32.totalorder %s75, %s77
    %p81 = scmp.eq.s32.totalorder %s15, 0
    %p82 = por %p80, %p81
    %p83 = scmp.ne.s32.totalorder %s75, %s77
    %p84 = scmp.eq.s32.totalorder %s20, 1
    %p85 = por %p83, %p84
    %p86 = scmp.ne.s32.totalorder %s77, %s78
    %p87 = scmp.eq.s32.totalorder %s20, 0
    %p88 = por %p86, %p87
    %p89 = scmp.ne.s32.totalorder %s77, %s78
    %p90 = scmp.eq.s32.totalorder %s21, 1
    %p91 = por %p89, %p90
    %p93 = scmp.ne.s32.totalorder %s78, %s92
    %p94 = scmp.eq.s32.totalorder %s21, 0
    %p95 = por %p93, %p94
    %s97 = sadd.s32 %s96, 1
    %p100 = scmp.eq.s32.totalorder %s15, 1
    %p101 = scmp.ne.s32.totalorder %s96, %s98
    %p102 = scmp.eq.s32.totalorder %s15, 0
    %p103 = por %p101, %p102
    %p104 = scmp.ne.s32.totalorder %s96, %s98
    %p105 = scmp.eq.s32.totalorder %s20, 1
    %p106 = por %p104, %p105
    %p107 = scmp.ne.s32.totalorder %s98, %s99
    %p108 = scmp.eq.s32.totalorder %s20, 0
    %p109 = por %p107, %p108
    %p110 = scmp.ne.s32.totalorder %s98, %s99
    %p111 = scmp.eq.s32.totalorder %s21, 1
    %p112 = por %p110, %p111
    %p114 = scmp.ne.s32.totalorder %s99, %s113
    %p115 = scmp.eq.s32.totalorder %s21, 0
    %p116 = por %p114, %p115
    %s118 = sadd.s32 %s117, 1
    %p121 = scmp.eq.s32.totalorder %s15, 1
    %p122 = scmp.ne.s32.totalorder %s117, %s119
    %p123 = scmp.eq.s32.totalorder %s15, 0
    %p124 = por %p122, %p123
    %p125 = scmp.ne.s32.totalorder %s117, %s119
    %p126 = scmp.eq.s32.totalorder %s20, 1
    %p127 = por %p125, %p126
    %p128 = scmp.ne.s32.totalorder %s119, %s120
    %p129 = scmp.eq.s32.totalorder %s20, 0
    %p130 = por %p128, %p129
    %p131 = scmp.ne.s32.totalorder %s119, %s120
    %p132 = scmp.eq.s32.totalorder %s21, 1
    %p133 = por %p131, %p132
    %p135 = scmp.ne.s32.totalorder %s120, %s134
    %p136 = scmp.eq.s32.totalorder %s21, 0
    %p137 = por %p135, %p136
    %s139 = sadd.s32 %s138, 1
    %p142 = scmp.eq.s32.totalorder %s15, 1
    %p143 = scmp.ne.s32.totalorder %s138, %s140
    %p144 = scmp.eq.s32.totalorder %s15, 0
    %p145 = por %p143, %p144
    %p146 = scmp.ne.s32.totalorder %s138, %s140
    %p147 = scmp.eq.s32.totalorder %s20, 1
    %p148 = por %p146, %p147
    %p149 = scmp.ne.s32.totalorder %s140, %s141
    %p150 = scmp.eq.s32.totalorder %s20, 0
    %p151 = por %p149, %p150
    %p152 = scmp.ne.s32.totalorder %s140, %s141
    %p153 = scmp.eq.s32.totalorder %s21, 1
    %p154 = por %p152, %p153
    %p156 = scmp.ne.s32.totalorder %s141, %s155
    %p157 = scmp.eq.s32.totalorder %s21, 0
    %p158 = por %p156, %p157
    %s160 = sadd.s32 %s159, 1
    %p163 = scmp.eq.s32.totalorder %s15, 1
    %p164 = scmp.ne.s32.totalorder %s159, %s161
    %p165 = scmp.eq.s32.totalorder %s15, 0
    %p166 = por %p164, %p165
    %p167 = scmp.ne.s32.totalorder %s159, %s161
    %p168 = scmp.eq.s32.totalorder %s20, 1
    %p169 = por %p167, %p168
    %p170 = scmp.ne.s32.totalorder %s161, %s162
    %p171 = scmp.eq.s32.totalorder %s20, 0
    %p172 = por %p170, %p171
    %p173 = scmp.ne.s32.totalorder %s161, %s162
    %p174 = scmp.eq.s32.totalorder %s21, 1
    %p175 = por %p173, %p174
    %p177 = scmp.ne.s32.totalorder %s162, %s176
    %p178 = scmp.eq.s32.totalorder %s21, 0
    %p179 = por %p177, %p178
    %s181 = sadd.s32 %s180, 1
    %p184 = scmp.eq.s32.totalorder %s15, 1
    %p185 = scmp.ne.s32.totalorder %s180, %s182
    %p186 = scmp.eq.s32.totalorder %s15, 0
    %p187 = por %p185, %p186
    %p188 = scmp.ne.s32.totalorder %s180, %s182
    %p189 = scmp.eq.s32.totalorder %s20, 1
    %p190 = por %p188, %p189
    %p191 = scmp.ne.s32.totalorder %s182, %s183
    %p192 = scmp.eq.s32.totalorder %s20, 0
    %p193 = por %p191, %p192
    %p194 = scmp.ne.s32.totalorder %s182, %s183
    %p195 = scmp.eq.s32.totalorder %s21, 1
    %p196 = por %p194, %p195
    %p198 = scmp.ne.s32.totalorder %s183, %s197
    %p199 = scmp.eq.s32.totalorder %s21, 0
    %p200 = por %p198, %p199
    %s202 = sadd.s32 %s201, 1
    %p205 = scmp.eq.s32.totalorder %s15, 1
    %p206 = scmp.ne.s32.totalorder %s201, %s203
    %p207 = scmp.eq.s32.totalorder %s15, 0
    %p208 = por %p206, %p207
    %p209 = scmp.ne.s32.totalorder %s201, %s203
    %p210 = scmp.eq.s32.totalorder %s20, 1
    %p211 = por %p209, %p210
    %p212 = scmp.ne.s32.totalorder %s203, %s204
    %p213 = scmp.eq.s32.totalorder %s20, 0
    %p214 = por %p212, %p213
    %p215 = scmp.ne.s32.totalorder %s203, %s204
    %p216 = scmp.eq.s32.totalorder %s21, 1
    %p217 = por %p215, %p216
    %p219 = scmp.ne.s32.totalorder %s204, %s218
    %p220 = scmp.eq.s32.totalorder %s21, 0
    %p221 = por %p219, %p220
    %s222 = ssub.s32 %s15, %s22
    %p223 = scmp.eq.s32.totalorder %s222, 0
    %s225 = sadd.s32 %s224, 1
    %s226 = scalar_select %p223, %s224, %s225
    %p229 = pneg %p223
    %p230 = scmp.eq.s32.totalorder %s15, 1
    %p231 = por %p229, %p230
    %p232 = scmp.ne.s32.totalorder %s224, %s227
    %p233 = scmp.eq.s32.totalorder %s15, 0
    %p234 = por %p232, %p233
    %p235 = scmp.ne.s32.totalorder %s224, %s227
    %p236 = scmp.eq.s32.totalorder %s20, 1
    %p237 = por %p235, %p236
    %p238 = scmp.ne.s32.totalorder %s227, %s228
    %p239 = scmp.eq.s32.totalorder %s20, 0
    %p240 = por %p238, %p239
    %p241 = scmp.ne.s32.totalorder %s227, %s228
    %p242 = scmp.eq.s32.totalorder %s21, 1
    %p243 = por %p241, %p242
    %p245 = scmp.ne.s32.totalorder %s228, %s244
    %p246 = scmp.eq.s32.totalorder %s21, 0
    %p247 = por %p245, %p246
    %p248 = scmp.le.s32.totalorder 1, %s15
    %p249 = scmp.lt.s32.totalorder %s15, 3
    %p250 = pnand %p248, %p249
    %p251 = pneg %p250
    // Predicated region
    $region9: #{up_forward.2} parent=5 // pred_check
      _
    $region10: #{up_forward.2} parent=5 // pred_check_branch
      %253 = sbr.rel (%p250) target = $region12
    $region11: #{up_forward.2} parent=5 // pred_region
      %s254 = ssub.s32 %s15, 1
      // Predicated region
      $region13: #{up_forward.2} parent=11 // pred_check
        %p255 = pneg %p88
      $region14: #{up_forward.2} parent=11 // pred_check_branch
        %257 = sbr.rel (%p255) target = $region16
      $region15: #{up_forward.2} parent=11 // pred_region
        _
      $region16: #{up_forward.2} parent=11 // pred_fallthru
        _
      // Predicated region
      $region17: #{up_forward.2} parent=11 // pred_check
        %p258 = pneg %p109
      $region18: #{up_forward.2} parent=11 // pred_check_branch
        %260 = sbr.rel (%p258) target = $region20
      $region19: #{up_forward.2} parent=11 // pred_region
        _
      $region20: #{up_forward.2} parent=11 // pred_fallthru
        _
      // Predicated region
      $region21: #{up_forward.2} parent=11 // pred_check
        %p261 = pneg %p130
      $region22: #{up_forward.2} parent=11 // pred_check_branch
        %263 = sbr.rel (%p261) target = $region24
      $region23: #{up_forward.2} parent=11 // pred_region
        _
      $region24: #{up_forward.2} parent=11 // pred_fallthru
        _
      // Predicated region
      $region25: #{up_forward.2} parent=11 // pred_check
        %p264 = pneg %p151
      $region26: #{up_forward.2} parent=11 // pred_check_branch
        %266 = sbr.rel (%p264) target = $region28
      $region27: #{up_forward.2} parent=11 // pred_region
        _
      $region28: #{up_forward.2} parent=11 // pred_fallthru
        _
      // Predicated region
      $region29: #{up_forward.2} parent=11 // pred_check
        %p267 = pneg %p172
      $region30: #{up_forward.2} parent=11 // pred_check_branch
        %269 = sbr.rel (%p267) target = $region32
      $region31: #{up_forward.2} parent=11 // pred_region
        _
      $region32: #{up_forward.2} parent=11 // pred_fallthru
        _
      // Predicated region
      $region33: #{up_forward.2} parent=11 // pred_check
        %p270 = pneg %p193
      $region34: #{up_forward.2} parent=11 // pred_check_branch
        %272 = sbr.rel (%p270) target = $region36
      $region35: #{up_forward.2} parent=11 // pred_region
        _
      $region36: #{up_forward.2} parent=11 // pred_fallthru
        _
      // Predicated region
      $region37: #{up_forward.2} parent=11 // pred_check
        %p273 = pneg %p214
      $region38: #{up_forward.2} parent=11 // pred_check_branch
        %275 = sbr.rel (%p273) target = $region40
      $region39: #{up_forward.2} parent=11 // pred_region
        _
      $region40: #{up_forward.2} parent=11 // pred_fallthru
        _
    $region12: #{up_forward.2} parent=5 // pred_fallthru
      _
    %p276 = scmp.lt.s32.totalorder %s15, 2
    // Predicated region
    $region41: #{up_forward.2} parent=5 // pred_check
      %p277 = pneg %p276
    $region42: #{up_forward.2} parent=5 // pred_check_branch
      %279 = sbr.rel (%p277) target = $region44
    $region43: #{up_forward.2} parent=5 // pred_region
      // Predicated region
      $region45: #{up_forward.2} parent=43 // pred_check
        %p280 = pneg %p35
      $region46: #{up_forward.2} parent=43 // pred_check_branch
        %282 = sbr.rel (%p280) target = $region48
      $region47: #{up_forward.2} parent=43 // pred_region
        %p283 = scmp.lt.s32.totalorder %s15, 1
        %s284 = scalar_select %p283, %s15, 1
        %s285 = smul.addr %s284, 4
        %s286 = scalar_lea.vmem %s0, %s285
      $region48: #{up_forward.2} parent=43 // pred_fallthru
        _
      // Predicated region
      $region49: #{up_forward.2} parent=43 // pred_check
        %p287 = pneg %p61
      $region50: #{up_forward.2} parent=43 // pred_check_branch
        %289 = sbr.rel (%p287) target = $region52
      $region51: #{up_forward.2} parent=43 // pred_region
        %p290 = scmp.lt.s32.totalorder %s15, 1
        %s291 = scalar_select %p290, %s15, 1
        %s292 = smul.addr %s291, 2
        %s293 = smul.addr %s292, 4
        %s294 = scalar_lea.vmem %s1, %s293
      $region52: #{up_forward.2} parent=43 // pred_fallthru
        _
    $region44: #{up_forward.2} parent=5 // pred_fallthru
      _
    %p295 = scmp.le.s32.totalorder 1, %s15
    %p296 = scmp.lt.s32.totalorder %s15, 3
    %p297 = pnand %p295, %p296
    %p298 = pneg %p297
    // Predicated region
    $region53: #{up_forward.2} parent=5 // pred_check
      _
    $region54: #{up_forward.2} parent=5 // pred_check_branch
      %300 = sbr.rel (%p297) target = $region56
    $region55: #{up_forward.2} parent=5 // pred_region
      %s301 = ssub.s32 %s15, 1
      %p302 = scmp.lt.s32.totalorder %s20, 1
      %s303 = scalar_select %p302, %s20, 1
      %s304 = smul.addr %s303, 4
      %s305 = scalar_lea.vmem %s0, %s304
      %p306 = pneg %p41
      %p307 = pneg %p38
      %p308 = scmp.lt.s32.totalorder %s20, 1
      %s309 = scalar_select %p308, %s20, 1
      %s310 = smul.addr %s309, 2
      %s311 = smul.addr %s310, 4
      %s312 = scalar_lea.vmem %s1, %s311
      %p313 = pneg %p67
      %p314 = pneg %p64
      %p315 = pneg %p88
      %p316 = pneg %p85
      %p317 = pneg %p109
      %p318 = pneg %p106
      %p319 = pneg %p130
      %p320 = pneg %p127
      %p321 = pneg %p151
      %p322 = pneg %p148
      %p323 = pneg %p172
      %p324 = pneg %p169
      %p325 = pneg %p193
      %p326 = pneg %p190
      %p327 = pneg %p214
      %p328 = pneg %p211
      %p329 = pneg %p240
      %p330 = pneg %p237
      %p331 = scmp.lt.s32.totalorder %s20, 1
      %s332 = scalar_select %p331, %s20, 1
      %s333 = smul.addr %s332, 2
      %s334 = smul.addr %s333, 4
      %s335 = scalar_lea.vmem %s9, %s334
      %p336 = scmp.lt.s32.totalorder %s20, 1
      %s337 = scalar_select %p336, %s20, 1
      %s338 = smul.addr %s337, 4
      %s339 = scalar_lea.vmem %s0, %s338
      %p340 = scmp.lt.s32.totalorder %s20, 1
      %s341 = scalar_select %p340, %s20, 1
      %s342 = smul.addr %s341, 2
      %s343 = smul.addr %s342, 4
      %s344 = scalar_lea.vmem %s1, %s343
      %p345 = scmp.lt.s32.totalorder %s20, 1
      %s346 = scalar_select %p345, %s20, 1
      %s347 = smul.addr %s346, 2
      %s348 = smul.addr %s347, 4
      %s349 = scalar_lea.vmem %s9, %s348
      %v350 = vld [vmem:[%s2] sm:$0xf]
      %v351 = vld [vmem:[%s339] sm:$0xf]
      %v352 = vld [vmem:[%s3] sm:$0xf]
      %354 = vset.pattern.permute.xlu0 0
      %355 = vperm.xlu0 %354, %v352
      %v356 = vpop.permute.xlu0 %355
      %vm358 = vcmask 31744
      %v360 = vsel %vm358, %v350, 0
      %vm362 = vcmask 1043456
      %v364 = vsel %vm362, %v351, 0
      %366 = vmatprep.subr.mxu0 0.0
      %367 = vmatpush1.msra.mxu0 %v364
      %368 = vmatprep.subr.mxu0 0.0
      %369 = vmatpush1.msra.mxu0 0.0
      %370 = vmatprep.subr.mxu0 0.0
      %371 = vmatpush1.msra.mxu0 0.0
      %372 = vmatprep.subr.mxu0 0.0
      %373 = vmatpush1.msra.mxu0 0.0
      %374 = vmatprep.subr.mxu0 0.0
      %375 = vmatpush1.msra.mxu0 0.0
      %376 = vmatprep.subr.mxu0 0.0
      %377 = vmatpush1.msra.mxu0 0.0
      %378 = vmatprep.subr.mxu0 0.0
      %379 = vmatpush1.msra.mxu0 0.0
      %380 = vmatprep.subr.mxu0 0.0
      %381 = vmatpush1.msra.mxu0 0.0
      %382 = vmatprep.subr.mxu0 0.0
      %383 = vmatpush1.msra.mxu0 0.0
      %384 = vmatprep.subr.mxu0 0.0
      %385 = vmatpush1.msra.mxu0 0.0
      %386 = vmatprep.subr.mxu0 0.0
      %387 = vmatpush1.msra.mxu0 0.0
      %388 = vmatprep.subr.mxu0 0.0
      %389 = vmatpush1.msra.mxu0 0.0
      %390 = vmatprep.subr.mxu0 0.0
      %391 = vmatpush1.msra.mxu0 0.0
      %392 = vmatprep.subr.mxu0 0.0
      %393 = vmatpush1.msra.mxu0 0.0
      %394 = vmatprep.subr.mxu0 0.0
      %395 = vmatpush1.msra.mxu0 0.0
      %396 = vmatprep.subr.mxu0 0.0
      %397 = vmatpush1.msra.mxu0 0.0
      %398 = vmatprep.subr.mxu0 0.0
      %399 = vmatpush1.msra.mxu0 0.0
      %400 = vmatprep.subr.mxu0 0.0
      %401 = vmatpush1.msra.mxu0 0.0
      %402 = vmatprep.subr.mxu0 0.0
      %403 = vmatpush1.msra.mxu0 0.0
      %404 = vmatprep.subr.mxu0 0.0
      %405 = vmatpush1.msra.mxu0 0.0
      %406 = vmatprep.subr.mxu0 0.0
      %407 = vmatpush1.msra.mxu0 0.0
      %408 = vmatprep.subr.mxu0 0.0
      %409 = vmatpush1.msra.mxu0 0.0
      %410 = vmatprep.subr.mxu0 0.0
      %411 = vmatpush1.msra.mxu0 0.0
      %412 = vmatprep.subr.mxu0 0.0
      %413 = vmatpush1.msra.mxu0 0.0
      %414 = vmatprep.subr.mxu0 0.0
      %415 = vmatpush1.msra.mxu0 0.0
      %416 = vmatprep.subr.mxu0 0.0
      %417 = vmatpush1.msra.mxu0 0.0
      %418 = vmatprep.subr.mxu0 0.0
      %419 = vmatpush1.msra.mxu0 0.0
      %420 = vmatprep.subr.mxu0 0.0
      %421 = vmatpush1.msra.mxu0 0.0
      %422 = vmatprep.subr.mxu0 0.0
      %423 = vmatpush1.msra.mxu0 0.0
      %424 = vmatprep.subr.mxu0 0.0
      %425 = vmatpush1.msra.mxu0 0.0
      %426 = vmatprep.subr.mxu0 0.0
      %427 = vmatpush1.msra.mxu0 0.0
      %428 = vmatprep.subr.mxu0 0.0
      %429 = vmatpush1.msra.mxu0 0.0
      %430 = vmatprep.mubr.f32.mxu0 0.0
      %431 = vmatmul.mubr.f32.gmra.mrb[0].mxu0 %v360
      %v432 = vpop.f32.mrb[0].mxu0
      %v433 = vadd.f32 %v356, %v432
      %v434 = vpop.f32.mrb[0].mxu0
      %435 = vdwg.mxu0
      %v436 = vld [vmem:[%s4] sm:$0xff]
      %v437 = vld [vmem:[%s4 + $0x8] sm:$0xff]
      %v438 = vld [vmem:[%s4 + $0x10] sm:$0xff]
      %v439 = vld [vmem:[%s4 + $0x18] sm:$0xff]
      %v440 = vld [vmem:[%s4 + $0x20] sm:$0xff]
      %v441 = vld [vmem:[%s4 + $0x28] sm:$0xff]
      %v442 = vld [vmem:[%s4 + $0x30] sm:$0xff]
      %v443 = vld [vmem:[%s4 + $0x38] sm:$0xff]
      %v444 = vld [vmem:[%s4 + $0x40] sm:$0xff]
      %v445 = vld [vmem:[%s4 + $0x48] sm:$0xff]
      %v446 = vld [vmem:[%s4 + $0x50] sm:$0xff]
      %v447 = vld [vmem:[%s4 + $0x58] sm:$0xff]
      %v448 = vld [vmem:[%s4 + $0x60] sm:$0xff]
      %v449 = vld [vmem:[%s4 + $0x68] sm:$0xff]
      %v450 = vld [vmem:[%s4 + $0x70] sm:$0xff]
      %v451 = vld [vmem:[%s4 + $0x78] sm:$0xff]
      %vm452 = vcmask 523264
      %v454 = vsel %vm452, %v433, 0
      %456 = vmatprep.subr.mxu0 %v437
      %457 = vmatpush1.msra.mxu0 %v436
      %458 = vmatprep.subr.mxu0 %v439
      %459 = vmatpush1.msra.mxu0 %v438
      %460 = vmatprep.subr.mxu0 %v441
      %461 = vmatpush1.msra.mxu0 %v440
      %462 = vmatprep.subr.mxu0 %v443
      %463 = vmatpush1.msra.mxu0 %v442
      %464 = vmatprep.subr.mxu0 %v445
      %465 = vmatpush1.msra.mxu0 %v444
      %466 = vmatprep.subr.mxu0 %v447
      %467 = vmatpush1.msra.mxu0 %v446
      %468 = vmatprep.subr.mxu0 %v449
      %469 = vmatpush1.msra.mxu0 %v448
      %470 = vmatprep.subr.mxu0 %v451
      %471 = vmatpush1.msra.mxu0 %v450
      %472 = vmatprep.subr.mxu0 0.0
      %473 = vmatpush1.msra.mxu0 0.0
      %474 = vmatprep.subr.mxu0 0.0
      %475 = vmatpush1.msra.mxu0 0.0
      %476 = vmatprep.subr.mxu0 0.0
      %477 = vmatpush1.msra.mxu0 0.0
      %478 = vmatprep.subr.mxu0 0.0
      %479 = vmatpush1.msra.mxu0 0.0
      %480 = vmatprep.subr.mxu0 0.0
      %481 = vmatpush1.msra.mxu0 0.0
      %482 = vmatprep.subr.mxu0 0.0
      %483 = vmatpush1.msra.mxu0 0.0
      %484 = vmatprep.subr.mxu0 0.0
      %485 = vmatpush1.msra.mxu0 0.0
      %486 = vmatprep.subr.mxu0 0.0
      %487 = vmatpush1.msra.mxu0 0.0
      %488 = vmatprep.subr.mxu0 0.0
      %489 = vmatpush1.msra.mxu0 0.0
      %490 = vmatprep.subr.mxu0 0.0
      %491 = vmatpush1.msra.mxu0 0.0
      %492 = vmatprep.subr.mxu0 0.0
      %493 = vmatpush1.msra.mxu0 0.0
      %494 = vmatprep.subr.mxu0 0.0
      %495 = vmatpush1.msra.mxu0 0.0
      %496 = vmatprep.subr.mxu0 0.0
      %497 = vmatpush1.msra.mxu0 0.0
      %498 = vmatprep.subr.mxu0 0.0
      %499 = vmatpush1.msra.mxu0 0.0
      %500 = vmatprep.subr.mxu0 0.0
      %501 = vmatpush1.msra.mxu0 0.0
      %502 = vmatprep.subr.mxu0 0.0
      %503 = vmatpush1.msra.mxu0 0.0
      %504 = vmatprep.subr.mxu0 0.0
      %505 = vmatpush1.msra.mxu0 0.0
      %506 = vmatprep.subr.mxu0 0.0
      %507 = vmatpush1.msra.mxu0 0.0
      %508 = vmatprep.subr.mxu0 0.0
      %509 = vmatpush1.msra.mxu0 0.0
      %510 = vmatprep.subr.mxu0 0.0
      %511 = vmatpush1.msra.mxu0 0.0
      %512 = vmatprep.subr.mxu0 0.0
      %513 = vmatpush1.msra.mxu0 0.0
      %514 = vmatprep.subr.mxu0 0.0
      %515 = vmatpush1.msra.mxu0 0.0
      %516 = vmatprep.subr.mxu0 0.0
      %517 = vmatpush1.msra.mxu0 0.0
      %518 = vmatprep.subr.mxu0 0.0
      %519 = vmatpush1.msra.mxu0 0.0
      %520 = vmatprep.mubr.f32.mxu0 0.0
      %521 = vmatmul.mubr.f32.gmra.mrb[0].mxu0 %v454
      %v522 = vpop.f32.mrb[0].mxu0
      %v523 = vadd.f32 0.0, %v522
      %v524 = vpop.f32.mrb[0].mxu0
      %v525 = vadd.f32 0.0, %v524
      %526 = vdwg.mxu0
      %v527 = vld [vmem:[%s344] sm:$0xff]
      %v528 = vld [vmem:[%s5] ss:$8 sm:$0x3]
      %v530 = vcombine.high %v527, %v527
      %532 = vrot.lane.b32.xlu0 %v527, 17
      %v533 = vpop.permute.xlu0 %532
      %534 = vrot.lane.b32.xlu0 %v530, 17
      %v535 = vpop.permute.xlu0 %534
      %v536 = vlaneseq
      %v537 = vand.u32 %v536, 127
      %vm538 = vcmp.lt.s32.totalorder %v537, 17
      %v539 = vsel %vm538, %v533, %v535
      %v540 = vsel %vm538, %v535, %v533
      %v542 = vlaneseq
      %v543 = vshrl.u32 %v542, 7
      %v544 = vsub.s32 0, %v543
      %v545 = vrot.slane %v528, %v544
      %v546 = vlaneseq
      %v547 = vshrl.u32 %v546, 7
      %v548 = vsub.s32 1, %v547
      %v549 = vrot.slane %v528, %v548
      %v552 = vmul.f32 %v540, %v545
      %v553 = vmul.f32 %v539, %v549
      %554 = vst [vmem:[#allocation2] sm:$0xf] %v552
      %555 = vst [vmem:[#allocation2 + $0x8] sm:$0xf] %v553
      %556 = vrot.lane.b32.xlu0 %v523, 17
      %v557 = vpop.permute.xlu0 %556
      %558 = vrot.lane.b32.xlu0 %v525, 17
      %v559 = vpop.permute.xlu0 %558
      %v560 = vsel %vm538, %v557, %v559
      %v561 = vsel %vm538, %v559, %v557
      %v562 = vmul.f32 %v561, %v545
      %v563 = vmul.f32 %v560, %v549
      %v566 = vrot.slane %v562, 4
      %v567 = vrot.slane %v563, 4
      %570 = vst [vmem:[#allocation2] sm:$0xf0] %v566
      %571 = vst [vmem:[#allocation2 + $0x8] sm:$0xf0] %v567
      %s572 = scalar_lea.vmem %s5, 1
      %v573 = vld [vmem:[%s572] ss:$8 sm:$0x3]
      %574 = vrot.lane.b32.xlu0 %v527, 16
      %v575 = vpop.permute.xlu0 %574
      %576 = vrot.lane.b32.xlu0 %v530, 16
      %v577 = vpop.permute.xlu0 %576
      %vm578 = vcmp.lt.s32.totalorder %v537, 16
      %v579 = vsel %vm578, %v575, %v577
      %v580 = vsel %vm578, %v577, %v575
      %v582 = vlaneseq
      %v583 = vshrl.u32 %v582, 7
      %v584 = vsub.s32 0, %v583
      %v585 = vrot.slane %v573, %v584
      %v586 = vlaneseq
      %v587 = vshrl.u32 %v586, 7
      %v588 = vsub.s32 1, %v587
      %v589 = vrot.slane %v573, %v588
      %v592 = vmul.f32 %v580, %v585
      %v593 = vmul.f32 %v579, %v589
      %594 = vst [vmem:[#allocation2 + $0x10] sm:$0xf] %v592
      %595 = vst [vmem:[#allocation2 + $0x18] sm:$0xf] %v593
      %596 = vrot.lane.b32.xlu0 %v523, 16
      %v597 = vpop.permute.xlu0 %596
      %598 = vrot.lane.b32.xlu0 %v525, 16
      %v599 = vpop.permute.xlu0 %598
      %v600 = vsel %vm578, %v597, %v599
      %v601 = vsel %vm578, %v599, %v597
      %v602 = vmul.f32 %v601, %v585
      %v603 = vmul.f32 %v600, %v589
      %v606 = vrot.slane %v602, 4
      %v607 = vrot.slane %v603, 4
      %610 = vst [vmem:[#allocation2 + $0x10] sm:$0xf0] %v606
      %611 = vst [vmem:[#allocation2 + $0x18] sm:$0xf0] %v607
      %s612 = scalar_lea.vmem %s5, 2
      %v613 = vld [vmem:[%s612] ss:$8 sm:$0x3]
      %614 = vrot.lane.b32.xlu0 %v527, 15
      %v615 = vpop.permute.xlu0 %614
      %616 = vrot.lane.b32.xlu0 %v530, 15
      %v617 = vpop.permute.xlu0 %616
      %vm618 = vcmp.lt.s32.totalorder %v537, 15
      %v619 = vsel %vm618, %v615, %v617
      %v620 = vsel %vm618, %v617, %v615
      %v622 = vlaneseq
      %v623 = vshrl.u32 %v622, 7
      %v624 = vsub.s32 0, %v623
      %v625 = vrot.slane %v613, %v624
      %v626 = vlaneseq
      %v627 = vshrl.u32 %v626, 7
      %v628 = vsub.s32 1, %v627
      %v629 = vrot.slane %v613, %v628
      %v632 = vmul.f32 %v620, %v625
      %v633 = vmul.f32 %v619, %v629
      %634 = vst [vmem:[#allocation2 + $0x20] sm:$0xf] %v632
      %635 = vst [vmem:[#allocation2 + $0x28] sm:$0xf] %v633
      %636 = vrot.lane.b32.xlu0 %v523, 15
      %v637 = vpop.permute.xlu0 %636
      %638 = vrot.lane.b32.xlu0 %v525, 15
      %v639 = vpop.permute.xlu0 %638
      %v640 = vsel %vm618, %v637, %v639
      %v641 = vsel %vm618, %v639, %v637
      %v642 = vmul.f32 %v641, %v625
      %v643 = vmul.f32 %v640, %v629
      %v646 = vrot.slane %v642, 4
      %v647 = vrot.slane %v643, 4
      %650 = vst [vmem:[#allocation2 + $0x20] sm:$0xf0] %v646
      %651 = vst [vmem:[#allocation2 + $0x28] sm:$0xf0] %v647
      %s652 = scalar_lea.vmem %s5, 3
      %v653 = vld [vmem:[%s652] ss:$8 sm:$0x3]
      %654 = vrot.lane.b32.xlu0 %v527, 1
      %v655 = vpop.permute.xlu0 %654
      %656 = vrot.lane.b32.xlu0 %v530, 1
      %v657 = vpop.permute.xlu0 %656
      %vm658 = vcmp.lt.s32.totalorder %v537, 1
      %v659 = vsel %vm658, %v655, %v657
      %v660 = vsel %vm658, %v657, %v655
      %v662 = vlaneseq
      %v663 = vshrl.u32 %v662, 7
      %v664 = vsub.s32 0, %v663
      %v665 = vrot.slane %v653, %v664
      %v666 = vlaneseq
      %v667 = vshrl.u32 %v666, 7
      %v668 = vsub.s32 1, %v667
      %v669 = vrot.slane %v653, %v668
      %v672 = vmul.f32 %v660, %v665
      %v673 = vmul.f32 %v659, %v669
      %674 = vst [vmem:[#allocation2 + $0x30] sm:$0xf] %v672
      %675 = vst [vmem:[#allocation2 + $0x38] sm:$0xf] %v673
      %676 = vrot.lane.b32.xlu0 %v523, 1
      %v677 = vpop.permute.xlu0 %676
      %678 = vrot.lane.b32.xlu0 %v525, 1
      %v679 = vpop.permute.xlu0 %678
      %v680 = vsel %vm658, %v677, %v679
      %v681 = vsel %vm658, %v679, %v677
      %v682 = vmul.f32 %v681, %v665
      %v683 = vmul.f32 %v680, %v669
      %v686 = vrot.slane %v682, 4
      %v687 = vrot.slane %v683, 4
      %690 = vst [vmem:[#allocation2 + $0x30] sm:$0xf0] %v686
      %691 = vst [vmem:[#allocation2 + $0x38] sm:$0xf0] %v687
      %692 = vst [vmem:[#allocation2 + $0x40] sm:$0xf] %v527
      %693 = vst [vmem:[#allocation2 + $0x48] sm:$0xf] %v530
      %v696 = vrot.slane %v523, 4
      %v697 = vrot.slane %v525, 4
      %700 = vst [vmem:[#allocation2 + $0x40] sm:$0xf0] %v696
      %701 = vst [vmem:[#allocation2 + $0x48] sm:$0xf0] %v697
      %s702 = scalar_lea.vmem %s5, 5
      %v703 = vld [vmem:[%s702] ss:$8 sm:$0x3]
      %704 = vrot.lane.b32.xlu0 %v527, 127
      %v705 = vpop.permute.xlu0 %704
      %706 = vrot.lane.b32.xlu0 %v530, 127
      %v707 = vpop.permute.xlu0 %706
      %vm708 = vcmp.lt.s32.totalorder %v537, 127
      %v709 = vsel %vm708, %v705, %v707
      %v710 = vsel %vm708, %v707, %v705
      %v712 = vlaneseq
      %v713 = vshrl.u32 %v712, 7
      %v714 = vsub.s32 0, %v713
      %v715 = vrot.slane %v703, %v714
      %v716 = vlaneseq
      %v717 = vshrl.u32 %v716, 7
      %v718 = vsub.s32 1, %v717
      %v719 = vrot.slane %v703, %v718
      %v722 = vmul.f32 %v709, %v715
      %v723 = vmul.f32 %v710, %v719
      %724 = vst [vmem:[#allocation2 + $0x50] sm:$0xf] %v722
      %725 = vst [vmem:[#allocation2 + $0x58] sm:$0xf] %v723
      %726 = vrot.lane.b32.xlu0 %v523, 127
      %v727 = vpop.permute.xlu0 %726
      %728 = vrot.lane.b32.xlu0 %v525, 127
      %v729 = vpop.permute.xlu0 %728
      %v730 = vsel %vm708, %v727, %v729
      %v731 = vsel %vm708, %v729, %v727
      %v732 = vmul.f32 %v730, %v715
      %v733 = vmul.f32 %v731, %v719
      %v736 = vrot.slane %v732, 4
      %v737 = vrot.slane %v733, 4
      %740 = vst [vmem:[#allocation2 + $0x50] sm:$0xf0] %v736
      %741 = vst [vmem:[#allocation2 + $0x58] sm:$0xf0] %v737
      %s742 = scalar_lea.vmem %s5, 6
      %v743 = vld [vmem:[%s742] ss:$8 sm:$0x3]
      %744 = vrot.lane.b32.xlu0 %v527, 113
      %v745 = vpop.permute.xlu0 %744
      %746 = vrot.lane.b32.xlu0 %v530, 113
      %v747 = vpop.permute.xlu0 %746
      %vm748 = vcmp.lt.s32.totalorder %v537, 113
      %v749 = vsel %vm748, %v745, %v747
      %v750 = vsel %vm748, %v747, %v745
      %v752 = vlaneseq
      %v753 = vshrl.u32 %v752, 7
      %v754 = vsub.s32 0, %v753
      %v755 = vrot.slane %v743, %v754
      %v756 = vlaneseq
      %v757 = vshrl.u32 %v756, 7
      %v758 = vsub.s32 1, %v757
      %v759 = vrot.slane %v743, %v758
      %v762 = vmul.f32 %v749, %v755
      %v763 = vmul.f32 %v750, %v759
      %764 = vst [vmem:[#allocation2 + $0x60] sm:$0xf] %v762
      %765 = vst [vmem:[#allocation2 + $0x68] sm:$0xf] %v763
      %766 = vrot.lane.b32.xlu0 %v523, 113
      %v767 = vpop.permute.xlu0 %766
      %768 = vrot.lane.b32.xlu0 %v525, 113
      %v769 = vpop.permute.xlu0 %768
      %v770 = vsel %vm748, %v767, %v769
      %v771 = vsel %vm748, %v769, %v767
      %v772 = vmul.f32 %v770, %v755
      %v773 = vmul.f32 %v771, %v759
      %v776 = vrot.slane %v772, 4
      %v777 = vrot.slane %v773, 4
      %780 = vst [vmem:[#allocation2 + $0x60] sm:$0xf0] %v776
      %781 = vst [vmem:[#allocation2 + $0x68] sm:$0xf0] %v777
      %s782 = scalar_lea.vmem %s5, 7
      %v783 = vld [vmem:[%s782] ss:$8 sm:$0x3]
      %784 = vrot.lane.b32.xlu0 %v527, 112
      %v785 = vpop.permute.xlu0 %784
      %786 = vrot.lane.b32.xlu0 %v530, 112
      %v787 = vpop.permute.xlu0 %786
      %vm788 = vcmp.lt.s32.totalorder %v537, 112
      %v789 = vsel %vm788, %v785, %v787
      %v790 = vsel %vm788, %v787, %v785
      %v792 = vlaneseq
      %v793 = vshrl.u32 %v792, 7
      %v794 = vsub.s32 0, %v793
      %v795 = vrot.slane %v783, %v794
      %v796 = vlaneseq
      %v797 = vshrl.u32 %v796, 7
      %v798 = vsub.s32 1, %v797
      %v799 = vrot.slane %v783, %v798
      %v802 = vmul.f32 %v789, %v795
      %v803 = vmul.f32 %v790, %v799
      %804 = vst [vmem:[#allocation2 + $0x70] sm:$0xf] %v802
      %805 = vst [vmem:[#allocation2 + $0x78] sm:$0xf] %v803
      %806 = vrot.lane.b32.xlu0 %v523, 112
      %v807 = vpop.permute.xlu0 %806
      %808 = vrot.lane.b32.xlu0 %v525, 112
      %v809 = vpop.permute.xlu0 %808
      %v810 = vsel %vm788, %v807, %v809
      %v811 = vsel %vm788, %v809, %v807
      %v812 = vmul.f32 %v810, %v795
      %v813 = vmul.f32 %v811, %v799
      %v816 = vrot.slane %v812, 4
      %v817 = vrot.slane %v813, 4
      %820 = vst [vmem:[#allocation2 + $0x70] sm:$0xf0] %v816
      %821 = vst [vmem:[#allocation2 + $0x78] sm:$0xf0] %v817
      %s822 = scalar_lea.vmem %s5, 16
      %v823 = vld [vmem:[%s822] ss:$8 sm:$0x3]
      %824 = vrot.lane.b32.xlu0 %v527, 111
      %v825 = vpop.permute.xlu0 %824
      %826 = vrot.lane.b32.xlu0 %v530, 111
      %v827 = vpop.permute.xlu0 %826
      %vm828 = vcmp.lt.s32.totalorder %v537, 111
      %v829 = vsel %vm828, %v825, %v827
      %v830 = vsel %vm828, %v827, %v825
      %v832 = vlaneseq
      %v833 = vshrl.u32 %v832, 7
      %v834 = vsub.s32 0, %v833
      %v835 = vrot.slane %v823, %v834
      %v836 = vlaneseq
      %v837 = vshrl.u32 %v836, 7
      %v838 = vsub.s32 1, %v837
      %v839 = vrot.slane %v823, %v838
      %v842 = vmul.f32 %v829, %v835
      %v843 = vmul.f32 %v830, %v839
      %844 = vst [vmem:[#allocation2 + $0x80] sm:$0xf] %v842
      %845 = vst [vmem:[#allocation2 + $0x88] sm:$0xf] %v843
      %846 = vrot.lane.b32.xlu0 %v523, 111
      %v847 = vpop.permute.xlu0 %846
      %848 = vrot.lane.b32.xlu0 %v525, 111
      %v849 = vpop.permute.xlu0 %848
      %v850 = vsel %vm828, %v847, %v849
      %v851 = vsel %vm828, %v849, %v847
      %v852 = vmul.f32 %v850, %v835
      %v853 = vmul.f32 %v851, %v839
      %v856 = vrot.slane %v852, 4
      %v857 = vrot.slane %v853, 4
      %860 = vst [vmem:[#allocation2 + $0x80] sm:$0xf0] %v856
      %861 = vst [vmem:[#allocation2 + $0x88] sm:$0xf0] %v857
      %v862 = vld [vmem:[%s6] sm:$0xf]
      %v863 = vld [vmem:[#allocation2] sm:$0xff]
      %v864 = vld [vmem:[#allocation2 + $0x8] sm:$0xff]
      %v865 = vld [vmem:[#allocation2 + $0x10] sm:$0xff]
      %v866 = vld [vmem:[#allocation2 + $0x18] sm:$0xff]
      %v867 = vld [vmem:[#allocation2 + $0x20] sm:$0xff]
      %v868 = vld [vmem:[#allocation2 + $0x28] sm:$0xff]
      %v869 = vld [vmem:[#allocation2 + $0x30] sm:$0xff]
      %v870 = vld [vmem:[#allocation2 + $0x38] sm:$0xff]
      %v871 = vld [vmem:[#allocation2 + $0x40] sm:$0xff]
      %v872 = vld [vmem:[#allocation2 + $0x48] sm:$0xff]
      %v873 = vld [vmem:[#allocation2 + $0x50] sm:$0xff]
      %v874 = vld [vmem:[#allocation2 + $0x58] sm:$0xff]
      %v875 = vld [vmem:[#allocation2 + $0x60] sm:$0xff]
      %v876 = vld [vmem:[#allocation2 + $0x68] sm:$0xff]
      %v877 = vld [vmem:[#allocation2 + $0x70] sm:$0xff]
      %v878 = vld [vmem:[#allocation2 + $0x78] sm:$0xff]
      %v879 = vld [vmem:[#allocation2 + $0x80] sm:$0xff]
      %v880 = vld [vmem:[#allocation2 + $0x88] sm:$0xff]
      %vm881 = vcmask 588800
      %v883 = vsel %vm881, %v862, 0
      %885 = vmatprep.subr.mxu0 %v864
      %886 = vmatpush1.msra.mxu0 %v863
      %887 = vmatprep.subr.mxu0 %v866
      %888 = vmatpush1.msra.mxu0 %v865
      %889 = vmatprep.subr.mxu0 %v868
      %890 = vmatpush1.msra.mxu0 %v867
      %891 = vmatprep.subr.mxu0 %v870
      %892 = vmatpush1.msra.mxu0 %v869
      %893 = vmatprep.subr.mxu0 %v872
      %894 = vmatpush1.msra.mxu0 %v871
      %895 = vmatprep.subr.mxu0 %v874
      %896 = vmatpush1.msra.mxu0 %v873
      %897 = vmatprep.subr.mxu0 %v876
      %898 = vmatpush1.msra.mxu0 %v875
      %899 = vmatprep.subr.mxu0 %v878
      %900 = vmatpush1.msra.mxu0 %v877
      %901 = vmatprep.subr.mxu0 %v880
      %902 = vmatpush1.msra.mxu0 %v879
      %903 = vmatprep.subr.mxu0 0.0
      %904 = vmatpush1.msra.mxu0 0.0
      %905 = vmatprep.subr.mxu0 0.0
      %906 = vmatpush1.msra.mxu0 0.0
      %907 = vmatprep.subr.mxu0 0.0
      %908 = vmatpush1.msra.mxu0 0.0
      %909 = vmatprep.subr.mxu0 0.0
      %910 = vmatpush1.msra.mxu0 0.0
      %911 = vmatprep.subr.mxu0 0.0
      %912 = vmatpush1.msra.mxu0 0.0
      %913 = vmatprep.subr.mxu0 0.0
      %914 = vmatpush1.msra.mxu0 0.0
      %915 = vmatprep.subr.mxu0 0.0
      %916 = vmatpush1.msra.mxu0 0.0
      %917 = vmatprep.subr.mxu0 0.0
      %918 = vmatpush1.msra.mxu0 0.0
      %919 = vmatprep.subr.mxu0 0.0
      %920 = vmatpush1.msra.mxu0 0.0
      %921 = vmatprep.subr.mxu0 0.0
      %922 = vmatpush1.msra.mxu0 0.0
      %923 = vmatprep.subr.mxu0 0.0
      %924 = vmatpush1.msra.mxu0 0.0
      %925 = vmatprep.subr.mxu0 0.0
      %926 = vmatpush1.msra.mxu0 0.0
      %927 = vmatprep.subr.mxu0 0.0
      %928 = vmatpush1.msra.mxu0 0.0
      %929 = vmatprep.subr.mxu0 0.0
      %930 = vmatpush1.msra.mxu0 0.0
      %931 = vmatprep.subr.mxu0 0.0
      %932 = vmatpush1.msra.mxu0 0.0
      %933 = vmatprep.subr.mxu0 0.0
      %934 = vmatpush1.msra.mxu0 0.0
      %935 = vmatprep.subr.mxu0 0.0
      %936 = vmatpush1.msra.mxu0 0.0
      %937 = vmatprep.subr.mxu0 0.0
      %938 = vmatpush1.msra.mxu0 0.0
      %939 = vmatprep.subr.mxu0 0.0
      %940 = vmatpush1.msra.mxu0 0.0
      %941 = vmatprep.subr.mxu0 0.0
      %942 = vmatpush1.msra.mxu0 0.0
      %943 = vmatprep.subr.mxu0 0.0
      %944 = vmatpush1.msra.mxu0 0.0
      %945 = vmatprep.subr.mxu0 0.0
      %946 = vmatpush1.msra.mxu0 0.0
      %947 = vmatprep.subr.mxu0 0.0
      %948 = vmatpush1.msra.mxu0 0.0
      %949 = vmatprep.mubr.f32.mxu0 0.0
      %950 = vmatmul.mubr.f32.gmra.mrb[0].mxu0 %v883
      %v951 = vpop.f32.mrb[0].mxu0
      %v952 = vadd.f32 0.0, %v951
      %v953 = vpop.f32.mrb[0].mxu0
      %v954 = vadd.f32 0.0, %v953
      %955 = vdwg.mxu0
      %v956 = vld [vmem:[%s7] sm:$0xf]
      %958 = vset.pattern.permute.xlu0 0
      %959 = vperm.xlu0 %958, %v956
      %v960 = vpop.permute.xlu0 %959
      %v962 = vmul.f32 %v952, %v960
      %v963 = vmul.f32 %v954, %v960
      %v964 = vld [vmem:[%s8] sm:$0xf]
      %966 = vset.pattern.permute.xlu0 0
      %967 = vperm.xlu0 %966, %v964
      %v968 = vpop.permute.xlu0 %967
      %v970 = vadd.f32 %v962, %v968
      %v971 = vadd.f32 %v963, %v968
      %vm972 = vcmp.ge.f32.partialorder %v970, 0.0
      %vm973 = vcmp.ge.f32.partialorder %v971, 0.0
      %v974 = vmul.f32 %v970, 0.01
      %v975 = vmul.f32 %v971, 0.01
      %v976 = vsel %vm972, %v970, %v974
      %v977 = vsel %vm973, %v971, %v975
      %v980 = vcombine.low %v976, %v977
      %982 = vst [vmem:[%s349] sm:$0xff] %v980
      %p983 = scmp.lt.s32.totalorder %s20, 1
      %s984 = scalar_select %p983, %s20, 1
      %s985 = smul.addr %s984, 2
      %s986 = smul.addr %s985, 4
      %s987 = scalar_lea.vmem %s9, %s986
      // Predicated region
      $region57: #{up_forward.2} parent=55 // pred_check
        %p988 = pneg %p237
      $region58: #{up_forward.2} parent=55 // pred_check_branch
        %990 = sbr.rel (%p988) target = $region60
      $region59: #{up_forward.2} parent=55 // pred_region
        _
      $region60: #{up_forward.2} parent=55 // pred_fallthru
        _
    $region56: #{up_forward.2} parent=5 // pred_fallthru
      _
    %p991 = scmp.le.s32.totalorder 2, %s15
    // Predicated region
    $region61: #{up_forward.2} parent=5 // pred_check
      %p992 = pneg %p991
    $region62: #{up_forward.2} parent=5 // pred_check_branch
      %994 = sbr.rel (%p992) target = $region64
    $region63: #{up_forward.2} parent=5 // pred_region
      %s995 = ssub.s32 %s15, 2
      // Predicated region
      $region65: #{up_forward.2} parent=63 // pred_check
        %p996 = pneg %p243
      $region66: #{up_forward.2} parent=63 // pred_check_branch
        %998 = sbr.rel (%p996) target = $region68
      $region67: #{up_forward.2} parent=63 // pred_region
        %p999 = scmp.lt.s32.totalorder %s21, 1
        %s1000 = scalar_select %p999, %s21, 1
        %s1001 = smul.addr %s1000, 2
        %s1002 = smul.addr %s1001, 4
        %s1003 = scalar_lea.vmem %s9, %s1002
      $region68: #{up_forward.2} parent=63 // pred_fallthru
        _
    $region64: #{up_forward.2} parent=5 // pred_fallthru
      _
  $region6: #{up_forward.2} parent=0 // loop_footer
    %s19 = sadd.s32 1, %s15
  $region7: #{up_forward.2} parent=0 // loop_footer_branch
    %14 = sbr.rel target = $region3
  $region8: #{up_forward.2} parent=0 // loop_exit
    _

</llo_original>
